<compile_context>
chip_gen: v7x
topology: tpu7x:2x2x1
jax: 0.10.0
libtpu: 0.0.40
codegen_flags: <defaults>
</compile_context>

<pallas_src>
import math
from functools import partial

import jax
import jax.numpy as jnp
from jax.experimental import pallas as pl
from jax.experimental.pallas import tpu as pltpu

LN_EPS = 1e-5


# ------------------------------ Pallas kernels ------------------------------

def _ln2d(x, gamma, beta):
    # x: (R, E), gamma/beta: (1, E)
    mu = jnp.mean(x, axis=-1, keepdims=True)
    var = jnp.mean(jnp.square(x - mu), axis=-1, keepdims=True)
    return (x - mu) * jax.lax.rsqrt(var + LN_EPS) * gamma + beta


def _attn_residual_kernel(num_heads,
                          x_ref, g1_ref, b1_ref,
                          wqkv_ref, bqkv_ref, wo_ref, bo_ref,
                          o_ref):
    # x_ref / o_ref: (1, S, E); all params are full resident blocks.
    S, E = x_ref.shape[1], x_ref.shape[2]
    D = E // num_heads
    scale = 1.0 / math.sqrt(D)

    x = x_ref[0]                                                # (S, E)
    xn = _ln2d(x, g1_ref[...], b1_ref[...])                     # fused pre-norm

    qkv = jnp.dot(xn, wqkv_ref[...],
                  preferred_element_type=jnp.float32) + bqkv_ref[...]   # (S, 3E)
    q = qkv[:, 0 * E:1 * E]
    k = qkv[:, 1 * E:2 * E]
    v = qkv[:, 2 * E:3 * E]

    # Per-head attention; out-projection folded into the head loop
    # (sum_h o_h @ Wo[hD:(h+1)D, :]) so no concatenate is needed.
    acc = jnp.zeros((S, E), jnp.float32)
    for h in range(num_heads):                                  # static unroll
        lo, hi = h * D, (h + 1) * D
        qh, kh, vh = q[:, lo:hi], k[:, lo:hi], v[:, lo:hi]      # (S, D)
        s = jnp.dot(qh, kh.T, preferred_element_type=jnp.float32) * scale  # (S, S)
        s = s - jnp.max(s, axis=-1, keepdims=True)
        p = jnp.exp(s)
        p = p / jnp.sum(p, axis=-1, keepdims=True)
        oh = jnp.dot(p, vh, preferred_element_type=jnp.float32)            # (S, D)
        acc = acc + jnp.dot(oh, wo_ref[lo:hi, :],
                            preferred_element_type=jnp.float32)
    # TODO(synk): attention-weight dropout (p=0.1) is identity in eval mode.
    o_ref[0] = x + acc + bo_ref[...]                            # fused residual


def _mlp_residual_kernel(x_ref, g2_ref, b2_ref,
                         w1_ref, c1_ref, w2_ref, c2_ref,
                         o_ref):
    # x_ref / o_ref: (TM, E) tile of flattened (B*S, E) tokens.
    x = x_ref[...]
    xn = _ln2d(x, g2_ref[...], b2_ref[...])
    h = jnp.dot(xn, w1_ref[...], preferred_element_type=jnp.float32) + c1_ref[...]
    h = jnp.maximum(h, 0.0)
    y = jnp.dot(h, w2_ref[...], preferred_element_type=jnp.float32) + c2_ref[...]
    # TODO(synk): nn.Dropout(p=0.1) is identity in eval mode; training-mode RNG dropout not implemented.
    o_ref[...] = x + y                                          # fused residual


# ------------------------------ wrappers ------------------------------------

def _attn_residual(x_bse, p, num_heads):
    B, S, E = x_bse.shape
    kern = partial(_attn_residual_kernel, num_heads)
    return pl.pallas_call(
        kern,
        out_shape=jax.ShapeDtypeStruct((B, S, E), jnp.float32),
        grid=(B,),
        in_specs=[
            pl.BlockSpec((1, S, E), lambda b: (b, 0, 0)),
            pl.BlockSpec((1, E), lambda b: (0, 0)),
            pl.BlockSpec((1, E), lambda b: (0, 0)),
            pl.BlockSpec((E, 3 * E), lambda b: (0, 0)),
            pl.BlockSpec((1, 3 * E), lambda b: (0, 0)),
            pl.BlockSpec((E, E), lambda b: (0, 0)),
            pl.BlockSpec((1, E), lambda b: (0, 0)),
        ],
        out_specs=pl.BlockSpec((1, S, E), lambda b: (b, 0, 0)),
        compiler_params=pltpu.CompilerParams(dimension_semantics=("parallel",)),
    )(x_bse, p["g1"], p["b1"], p["wqkv"], p["bqkv"], p["wo"], p["bo"])


def _mlp_residual(x_bse, p):
    B, S, E = x_bse.shape
    H = p["w1"].shape[1]
    N = B * S
    x2 = x_bse.reshape(N, E)                       # tokens are independent here

    # Row-tile: multiple of 8 sublanes, grow up to 256 rows while it divides N.
    if N % 8 == 0:
        tm = 8
        while tm * 2 <= min(N, 256) and N % (tm * 2) == 0:
            tm *= 2
    else:
        tm = N

    out = pl.pallas_call(
        _mlp_residual_kernel,
        out_shape=jax.ShapeDtypeStruct((N, E), jnp.float32),
        grid=(N // tm,),
        in_specs=[
            pl.BlockSpec((tm, E), lambda i: (i, 0)),
            pl.BlockSpec((1, E), lambda i: (0, 0)),
            pl.BlockSpec((1, E), lambda i: (0, 0)),
            pl.BlockSpec((E, H), lambda i: (0, 0)),
            pl.BlockSpec((1, H), lambda i: (0, 0)),
            pl.BlockSpec((H, E), lambda i: (0, 0)),
            pl.BlockSpec((1, E), lambda i: (0, 0)),
        ],
        out_specs=pl.BlockSpec((tm, E), lambda i: (i, 0)),
        compiler_params=pltpu.CompilerParams(dimension_semantics=("parallel",)),
    )(x2, p["g2"], p["b2"], p["w1"], p["c1"], p["w2"], p["c2"])
    return out.reshape(B, S, E)


@partial(jax.jit, static_argnums=(2,))
def transformer_block(params, x_sbe, num_heads):
    """x_sbe: (S, B, E) float32 (PyTorch nn.MultiheadAttention default layout)."""
    x = jnp.transpose(x_sbe, (1, 0, 2))            # (B, S, E)  -- layout glue
    x = _attn_residual(x, params, num_heads)       # x + MHA(LN1(x))
    x = _mlp_residual(x, params)                   # x + MLP(LN2(x))
    return jnp.transpose(x, (1, 0, 2))             # back to (S, B, E)


# ----------------------------- parameters -----------------------------------

def init_params(key, embed_dim, num_heads, mlp_ratio=4.0):
    assert embed_dim % num_heads == 0
    hidden = int(embed_dim * mlp_ratio)
    ks = jax.random.split(key, 6)
    s_e = 1.0 / math.sqrt(embed_dim)
    s_h = 1.0 / math.sqrt(hidden)
    u = lambda k, shape, s: jax.random.uniform(k, shape, jnp.float32, -s, s)
    return {
        # LayerNorm 1 / 2 (PyTorch default: weight=1, bias=0)
        "g1": jnp.ones((1, embed_dim), jnp.float32),
        "b1": jnp.zeros((1, embed_dim), jnp.float32),
        "g2": jnp.ones((1, embed_dim), jnp.float32),
        "b2": jnp.zeros((1, embed_dim), jnp.float32),
        # MHA: combined QKV projection (stored (E, 3E) for right-multiply) + out-proj
        "wqkv": u(ks[0], (embed_dim, 3 * embed_dim), s_e),
        "bqkv": u(ks[1], (1, 3 * embed_dim), s_e),
        "wo": u(ks[2], (embed_dim, embed_dim), s_e),
        "bo": jnp.zeros((1, embed_dim), jnp.float32),
        # MLP
        "w1": u(ks[3], (embed_dim, hidden), s_e),
        "c1": u(ks[4], (1, hidden), s_e),
        "w2": u(ks[5], (hidden, embed_dim), s_h),
        "c2": jnp.zeros((1, embed_dim), jnp.float32),
    }


# --------------------------- pure-JAX reference ------------------------------

def transformer_block_ref(params, x_sbe, num_heads):
    S, B, E = x_sbe.shape
    D = E // num_heads

    def ln(x, g, b):
        mu = jnp.mean(x, -1, keepdims=True)
        var = jnp.mean((x - mu) ** 2, -1, keepdims=True)
        return (x - mu) / jnp.sqrt(var + LN_EPS) * g + b

    xn = ln(x_sbe, params["g1"][0], params["b1"][0])
    qkv = xn @ params["wqkv"] + params["bqkv"][0]              # (S, B, 3E)
    q, k, v = jnp.split(qkv, 3, axis=-1)

    def heads(t):                                              # (S,B,E)->(B,H,S,D)
        return t.reshape(S, B, num_heads, D).transpose(1, 2, 0, 3)

    qh, kh, vh = heads(q), heads(k), heads(v)
    scores = jnp.einsum("bhqd,bhkd->bhqk", qh, kh) / math.sqrt(D)
    p = jax.nn.softmax(scores, axis=-1)
    o = jnp.einsum("bhqk,bhkd->bhqd", p, vh)                   # (B,H,S,D)
    o = o.transpose(2, 0, 1, 3).reshape(S, B, E)
    o = o @ params["wo"] + params["bo"][0]
    x = x_sbe + o

    xn2 = ln(x, params["g2"][0], params["b2"][0])
    h = jax.nn.relu(xn2 @ params["w1"] + params["c1"][0])
    y = h @ params["w2"] + params["c2"][0]
    return x + y


# --------------------------------- main --------------------------------------

if __name__ == "__main__":
    S, B, E, NUM_HEADS = 8, 2, 32, 4               # seq, batch, embed_dim, heads

    key = jax.random.PRNGKey(0)
    kp, kx = jax.random.split(key)
    params = init_params(kp, E, NUM_HEADS, mlp_ratio=4.0)
    x = jax.random.normal(kx, (S, B, E), jnp.float32)

    out = jax.block_until_ready(transformer_block(params, x, NUM_HEADS))
    ref = jax.block_until_ready(transformer_block_ref(params, x, NUM_HEADS))

    assert out.shape == ref.shape, (out.shape, ref.shape)
    assert bool(jnp.all(jnp.isfinite(out))), "non-finite output"
    max_err = float(jnp.max(jnp.abs(out - ref)))
    tol = 5e-3 + 2e-2 * float(jnp.max(jnp.abs(ref)))
    assert max_err <= tol, f"mismatch: max|diff|={max_err} tol={tol}"
    print("KERNEL_OK")
</pallas_src>

<mosaic_0001>
module attributes {stable_mosaic.version = 11 : i64} {
  func.func @_mlp_residual_kernel(%arg0: i32, %arg1: memref<16x32xf32, #tpu.memory_space<vmem>>, %arg2: memref<1x32xf32, #tpu.memory_space<vmem>>, %arg3: memref<1x32xf32, #tpu.memory_space<vmem>>, %arg4: memref<32x128xf32, #tpu.memory_space<vmem>>, %arg5: memref<1x128xf32, #tpu.memory_space<vmem>>, %arg6: memref<128x32xf32, #tpu.memory_space<vmem>>, %arg7: memref<1x32xf32, #tpu.memory_space<vmem>>, %arg8: memref<16x32xf32, #tpu.memory_space<vmem>>) attributes {dimension_semantics = [#tpu.dimension_semantics<parallel>], iteration_bounds = array<i64: 1>, scalar_prefetch = 0 : i64, scratch_operands = 0 : i64, tpu.core_type = #tpu.core_type<tc>, window_params = [{transform_indices = @transform_0, window_bounds = array<i64: 16, 32>}, {pipeline_mode = #tpu.pipeline_mode<synchronous>, transform_indices = @transform_1, window_bounds = array<i64: 1, 32>}, {pipeline_mode = #tpu.pipeline_mode<synchronous>, transform_indices = @transform_2, window_bounds = array<i64: 1, 32>}, {pipeline_mode = #tpu.pipeline_mode<synchronous>, transform_indices = @transform_3, window_bounds = array<i64: 32, 128>}, {pipeline_mode = #tpu.pipeline_mode<synchronous>, transform_indices = @transform_4, window_bounds = array<i64: 1, 128>}, {pipeline_mode = #tpu.pipeline_mode<synchronous>, transform_indices = @transform_5, window_bounds = array<i64: 128, 32>}, {pipeline_mode = #tpu.pipeline_mode<synchronous>, transform_indices = @transform_6, window_bounds = array<i64: 1, 32>}, {transform_indices = @transform_7, window_bounds = array<i64: 16, 32>}]} {
    %c0 = arith.constant 0 : index
    %c0_0 = arith.constant 0 : index
    %0 = vector.load %arg1[%c0, %c0_0] : memref<16x32xf32, #tpu.memory_space<vmem>>, vector<16x32xf32>
    %c0_1 = arith.constant 0 : index
    %c0_2 = arith.constant 0 : index
    %1 = vector.load %arg2[%c0_1, %c0_2] : memref<1x32xf32, #tpu.memory_space<vmem>>, vector<1x32xf32>
    %c0_3 = arith.constant 0 : index
    %c0_4 = arith.constant 0 : index
    %2 = vector.load %arg3[%c0_3, %c0_4] : memref<1x32xf32, #tpu.memory_space<vmem>>, vector<1x32xf32>
    %cst = arith.constant dense<0.000000e+00> : vector<16xf32>
    %3 = vector.multi_reduction <add>, %0, %cst [1] : vector<16x32xf32> to vector<16xf32>
    %4 = vector.shape_cast %3 : vector<16xf32> to vector<16x1xf32>
    %cst_5 = arith.constant 3.200000e+01 : f32
    %5 = vector.broadcast %cst_5 : f32 to vector<16x1xf32>
    %6 = arith.divf %4, %5 : vector<16x1xf32>
    %7 = vector.broadcast %6 : vector<16x1xf32> to vector<16x32xf32>
    %8 = arith.subf %0, %7 : vector<16x32xf32>
    %9 = arith.mulf %8, %8 : vector<16x32xf32>
    %cst_6 = arith.constant dense<0.000000e+00> : vector<16xf32>
    %10 = vector.multi_reduction <add>, %9, %cst_6 [1] : vector<16x32xf32> to vector<16xf32>
    %11 = vector.shape_cast %10 : vector<16xf32> to vector<16x1xf32>
    %cst_7 = arith.constant 3.200000e+01 : f32
    %12 = vector.broadcast %cst_7 : f32 to vector<16x1xf32>
    %13 = arith.divf %11, %12 : vector<16x1xf32>
    %14 = vector.broadcast %6 : vector<16x1xf32> to vector<16x32xf32>
    %15 = arith.subf %0, %14 : vector<16x32xf32>
    %cst_8 = arith.constant 9.99999974E-6 : f32
    %16 = vector.broadcast %cst_8 : f32 to vector<16x1xf32>
    %17 = arith.addf %13, %16 : vector<16x1xf32>
    %18 = math.rsqrt %17 : vector<16x1xf32>
    %19 = vector.broadcast %18 : vector<16x1xf32> to vector<16x32xf32>
    %20 = arith.mulf %15, %19 : vector<16x32xf32>
    %21 = vector.broadcast %1 : vector<1x32xf32> to vector<16x32xf32>
    %22 = arith.mulf %20, %21 : vector<16x32xf32>
    %23 = vector.broadcast %2 : vector<1x32xf32> to vector<16x32xf32>
    %24 = arith.addf %22, %23 : vector<16x32xf32>
    %c0_9 = arith.constant 0 : index
    %c0_10 = arith.constant 0 : index
    %25 = vector.load %arg4[%c0_9, %c0_10] : memref<32x128xf32, #tpu.memory_space<vmem>>, vector<32x128xf32>
    %cst_11 = arith.constant dense<0.000000e+00> : vector<16x128xf32>
    %26 = tpu.matmul %24, %25, %cst_11 {dimension_numbers = #tpu.dot_dimension_numbers<[1], [0], [0], [1], [0, 0, 1, 1], [], []>} : vector<16x32xf32>, vector<32x128xf32>, vector<16x128xf32> -> vector<16x128xf32>
    %c0_12 = arith.constant 0 : index
    %c0_13 = arith.constant 0 : index
    %27 = vector.load %arg5[%c0_12, %c0_13] : memref<1x128xf32, #tpu.memory_space<vmem>>, vector<1x128xf32>
    %28 = vector.broadcast %27 : vector<1x128xf32> to vector<16x128xf32>
    %29 = arith.addf %26, %28 : vector<16x128xf32>
    %cst_14 = arith.constant 0.000000e+00 : f32
    %30 = vector.broadcast %cst_14 : f32 to vector<16x128xf32>
    %31 = arith.maximumf %29, %30 : vector<16x128xf32>
    %c0_15 = arith.constant 0 : index
    %c0_16 = arith.constant 0 : index
    %32 = vector.load %arg6[%c0_15, %c0_16] : memref<128x32xf32, #tpu.memory_space<vmem>>, vector<128x32xf32>
    %cst_17 = arith.constant dense<0.000000e+00> : vector<16x32xf32>
    %33 = tpu.matmul %31, %32, %cst_17 {dimension_numbers = #tpu.dot_dimension_numbers<[1], [0], [0], [1], [0, 0, 1, 1], [], []>} : vector<16x128xf32>, vector<128x32xf32>, vector<16x32xf32> -> vector<16x32xf32>
    %c0_18 = arith.constant 0 : index
    %c0_19 = arith.constant 0 : index
    %34 = vector.load %arg7[%c0_18, %c0_19] : memref<1x32xf32, #tpu.memory_space<vmem>>, vector<1x32xf32>
    %35 = vector.broadcast %34 : vector<1x32xf32> to vector<16x32xf32>
    %36 = arith.addf %33, %35 : vector<16x32xf32>
    %37 = arith.addf %0, %36 : vector<16x32xf32>
    %c0_20 = arith.constant 0 : index
    %c0_21 = arith.constant 0 : index
    %38 = vector.load %arg8[%c0_20, %c0_21] : memref<16x32xf32, #tpu.memory_space<vmem>>, vector<16x32xf32>
    tpu.vector_store %arg8[%c0_20, %c0_21], %37 {strides = array<i32>} : memref<16x32xf32, #tpu.memory_space<vmem>>, vector<16x32xf32>,
    return
  }
  func.func @transform_0(%arg0: i32) -> (i32, i32) {
    %c0_i32 = arith.constant 0 : i32
    %c0_i32_0 = arith.constant 0 : i32
    return %arg0, %c0_i32 : i32, i32
  }
  func.func @transform_1(%arg0: i32) -> (i32, i32) {
    %c0_i32 = arith.constant 0 : i32
    %c0_i32_0 = arith.constant 0 : i32
    %c0_i32_1 = arith.constant 0 : i32
    return %c0_i32, %c0_i32_0 : i32, i32
  }
  func.func @transform_2(%arg0: i32) -> (i32, i32) {
    %c0_i32 = arith.constant 0 : i32
    %c0_i32_0 = arith.constant 0 : i32
    %c0_i32_1 = arith.constant 0 : i32
    return %c0_i32, %c0_i32_0 : i32, i32
  }
  func.func @transform_3(%arg0: i32) -> (i32, i32) {
    %c0_i32 = arith.constant 0 : i32
    %c0_i32_0 = arith.constant 0 : i32
    %c0_i32_1 = arith.constant 0 : i32
    return %c0_i32, %c0_i32_0 : i32, i32
  }
  func.func @transform_4(%arg0: i32) -> (i32, i32) {
    %c0_i32 = arith.constant 0 : i32
    %c0_i32_0 = arith.constant 0 : i32
    %c0_i32_1 = arith.constant 0 : i32
    return %c0_i32, %c0_i32_0 : i32, i32
  }
  func.func @transform_5(%arg0: i32) -> (i32, i32) {
    %c0_i32 = arith.constant 0 : i32
    %c0_i32_0 = arith.constant 0 : i32
    %c0_i32_1 = arith.constant 0 : i32
    return %c0_i32, %c0_i32_0 : i32, i32
  }
  func.func @transform_6(%arg0: i32) -> (i32, i32) {
    %c0_i32 = arith.constant 0 : i32
    %c0_i32_0 = arith.constant 0 : i32
    %c0_i32_1 = arith.constant 0 : i32
    return %c0_i32, %c0_i32_0 : i32, i32
  }
  func.func @transform_7(%arg0: i32) -> (i32, i32) {
    %c0_i32 = arith.constant 0 : i32
    %c0_i32_0 = arith.constant 0 : i32
    return %arg0, %c0_i32 : i32, i32
  }
}

module attributes {stable_mosaic.version = 11 : i64} {
  func.func @_attn_residual_kernel(%arg0: i32, %arg1: memref<1x8x32xf32, #tpu.memory_space<vmem>>, %arg2: memref<1x32xf32, #tpu.memory_space<vmem>>, %arg3: memref<1x32xf32, #tpu.memory_space<vmem>>, %arg4: memref<32x96xf32, #tpu.memory_space<vmem>>, %arg5: memref<1x96xf32, #tpu.memory_space<vmem>>, %arg6: memref<32x32xf32, #tpu.memory_space<vmem>>, %arg7: memref<1x32xf32, #tpu.memory_space<vmem>>, %arg8: memref<1x8x32xf32, #tpu.memory_space<vmem>>) attributes {dimension_semantics = [#tpu.dimension_semantics<parallel>], iteration_bounds = array<i64: 2>, scalar_prefetch = 0 : i64, scratch_operands = 0 : i64, tpu.core_type = #tpu.core_type<tc>, window_params = [{transform_indices = @transform_0, window_bounds = array<i64: 1, 8, 32>}, {pipeline_mode = #tpu.pipeline_mode<synchronous>, transform_indices = @transform_1, window_bounds = array<i64: 1, 32>}, {pipeline_mode = #tpu.pipeline_mode<synchronous>, transform_indices = @transform_2, window_bounds = array<i64: 1, 32>}, {pipeline_mode = #tpu.pipeline_mode<synchronous>, transform_indices = @transform_3, window_bounds = array<i64: 32, 96>}, {pipeline_mode = #tpu.pipeline_mode<synchronous>, transform_indices = @transform_4, window_bounds = array<i64: 1, 96>}, {pipeline_mode = #tpu.pipeline_mode<synchronous>, transform_indices = @transform_5, window_bounds = array<i64: 32, 32>}, {pipeline_mode = #tpu.pipeline_mode<synchronous>, transform_indices = @transform_6, window_bounds = array<i64: 1, 32>}, {transform_indices = @transform_7, window_bounds = array<i64: 1, 8, 32>}]} {
    %c0 = arith.constant 0 : index
    %c0_0 = arith.constant 0 : index
    %c0_1 = arith.constant 0 : index
    %0 = vector.load %arg1[%c0, %c0_0, %c0_1] : memref<1x8x32xf32, #tpu.memory_space<vmem>>, vector<1x8x32xf32>
    %1 = vector.shape_cast %0 : vector<1x8x32xf32> to vector<8x32xf32>
    %c0_2 = arith.constant 0 : index
    %c0_3 = arith.constant 0 : index
    %2 = vector.load %arg2[%c0_2, %c0_3] : memref<1x32xf32, #tpu.memory_space<vmem>>, vector<1x32xf32>
    %c0_4 = arith.constant 0 : index
    %c0_5 = arith.constant 0 : index
    %3 = vector.load %arg3[%c0_4, %c0_5] : memref<1x32xf32, #tpu.memory_space<vmem>>, vector<1x32xf32>
    %cst = arith.constant dense<0.000000e+00> : vector<8xf32>
    %4 = vector.multi_reduction <add>, %1, %cst [1] : vector<8x32xf32> to vector<8xf32>
    %5 = vector.shape_cast %4 : vector<8xf32> to vector<8x1xf32>
    %cst_6 = arith.constant 3.200000e+01 : f32
    %6 = vector.broadcast %cst_6 : f32 to vector<8x1xf32>
    %7 = arith.divf %5, %6 : vector<8x1xf32>
    %8 = vector.broadcast %7 : vector<8x1xf32> to vector<8x32xf32>
    %9 = arith.subf %1, %8 : vector<8x32xf32>
    %10 = arith.mulf %9, %9 : vector<8x32xf32>
    %cst_7 = arith.constant dense<0.000000e+00> : vector<8xf32>
    %11 = vector.multi_reduction <add>, %10, %cst_7 [1] : vector<8x32xf32> to vector<8xf32>
    %12 = vector.shape_cast %11 : vector<8xf32> to vector<8x1xf32>
    %cst_8 = arith.constant 3.200000e+01 : f32
    %13 = vector.broadcast %cst_8 : f32 to vector<8x1xf32>
    %14 = arith.divf %12, %13 : vector<8x1xf32>
    %15 = vector.broadcast %7 : vector<8x1xf32> to vector<8x32xf32>
    %16 = arith.subf %1, %15 : vector<8x32xf32>
    %cst_9 = arith.constant 9.99999974E-6 : f32
    %17 = vector.broadcast %cst_9 : f32 to vector<8x1xf32>
    %18 = arith.addf %14, %17 : vector<8x1xf32>
    %19 = math.rsqrt %18 : vector<8x1xf32>
    %20 = vector.broadcast %19 : vector<8x1xf32> to vector<8x32xf32>
    %21 = arith.mulf %16, %20 : vector<8x32xf32>
    %22 = vector.broadcast %2 : vector<1x32xf32> to vector<8x32xf32>
    %23 = arith.mulf %21, %22 : vector<8x32xf32>
    %24 = vector.broadcast %3 : vector<1x32xf32> to vector<8x32xf32>
    %25 = arith.addf %23, %24 : vector<8x32xf32>
    %c0_10 = arith.constant 0 : index
    %c0_11 = arith.constant 0 : index
    %26 = vector.load %arg4[%c0_10, %c0_11] : memref<32x96xf32, #tpu.memory_space<vmem>>, vector<32x96xf32>
    %cst_12 = arith.constant dense<0.000000e+00> : vector<8x96xf32>
    %27 = tpu.matmul %25, %26, %cst_12 {dimension_numbers = #tpu.dot_dimension_numbers<[1], [0], [0], [1], [0, 0, 1, 1], [], []>} : vector<8x32xf32>, vector<32x96xf32>, vector<8x96xf32> -> vector<8x96xf32>
    %c0_13 = arith.constant 0 : index
    %c0_14 = arith.constant 0 : index
    %28 = vector.load %arg5[%c0_13, %c0_14] : memref<1x96xf32, #tpu.memory_space<vmem>>, vector<1x96xf32>
    %29 = vector.broadcast %28 : vector<1x96xf32> to vector<8x96xf32>
    %30 = arith.addf %27, %29 : vector<8x96xf32>
    %31 = vector.extract_strided_slice %30 {offsets = [0, 0], sizes = [8, 32], strides = [1, 1]} : vector<8x96xf32> to vector<8x32xf32>
    %32 = vector.extract_strided_slice %30 {offsets = [0, 32], sizes = [8, 32], strides = [1, 1]} : vector<8x96xf32> to vector<8x32xf32>
    %33 = vector.extract_strided_slice %30 {offsets = [0, 64], sizes = [8, 32], strides = [1, 1]} : vector<8x96xf32> to vector<8x32xf32>
    %cst_15 = arith.constant 0.000000e+00 : f32
    %34 = vector.broadcast %cst_15 : f32 to vector<8x32xf32>
    %35 = vector.extract_strided_slice %31 {offsets = [0, 0], sizes = [8, 8], strides = [1, 1]} : vector<8x32xf32> to vector<8x8xf32>
    %36 = vector.extract_strided_slice %32 {offsets = [0, 0], sizes = [8, 8], strides = [1, 1]} : vector<8x32xf32> to vector<8x8xf32>
    %37 = vector.extract_strided_slice %33 {offsets = [0, 0], sizes = [8, 8], strides = [1, 1]} : vector<8x32xf32> to vector<8x8xf32>
    %38 = tpu.transpose %36, [1, 0] : vector<8x8xf32> -> vector<8x8xf32>
    %cst_16 = arith.constant dense<0.000000e+00> : vector<8x8xf32>
    %39 = tpu.matmul %35, %38, %cst_16 {dimension_numbers = #tpu.dot_dimension_numbers<[1], [0], [0], [1], [0, 0, 1, 1], [], []>} : vector<8x8xf32>, vector<8x8xf32>, vector<8x8xf32> -> vector<8x8xf32>
    %cst_17 = arith.constant 0.353553385 : f32
    %40 = vector.broadcast %cst_17 : f32 to vector<8x8xf32>
    %41 = arith.mulf %39, %40 : vector<8x8xf32>
    %cst_18 = arith.constant dense<0xFF800000> : vector<8xf32>
    %42 = vector.multi_reduction <maximumf>, %41, %cst_18 [1] : vector<8x8xf32> to vector<8xf32>
    %43 = vector.shape_cast %42 : vector<8xf32> to vector<8x1xf32>
    %44 = vector.broadcast %43 : vector<8x1xf32> to vector<8x8xf32>
    %45 = arith.subf %41, %44 : vector<8x8xf32>
    %46 = math.exp %45 : vector<8x8xf32>
    %cst_19 = arith.constant dense<0.000000e+00> : vector<8xf32>
    %47 = vector.multi_reduction <add>, %46, %cst_19 [1] : vector<8x8xf32> to vector<8xf32>
    %48 = vector.shape_cast %47 : vector<8xf32> to vector<8x1xf32>
    %49 = vector.broadcast %48 : vector<8x1xf32> to vector<8x8xf32>
    %50 = arith.divf %46, %49 : vector<8x8xf32>
    %cst_20 = arith.constant dense<0.000000e+00> : vector<8x8xf32>
    %51 = tpu.matmul %50, %37, %cst_20 {dimension_numbers = #tpu.dot_dimension_numbers<[1], [0], [0], [1], [0, 0, 1, 1], [], []>} : vector<8x8xf32>, vector<8x8xf32>, vector<8x8xf32> -> vector<8x8xf32>
    %c0_21 = arith.constant 0 : index
    %c0_22 = arith.constant 0 : index
    %52 = vector.load %arg6[%c0_21, %c0_22] : memref<32x32xf32, #tpu.memory_space<vmem>>, vector<8x32xf32>
    %cst_23 = arith.constant dense<0.000000e+00> : vector<8x32xf32>
    %53 = tpu.matmul %51, %52, %cst_23 {dimension_numbers = #tpu.dot_dimension_numbers<[1], [0], [0], [1], [0, 0, 1, 1], [], []>} : vector<8x8xf32>, vector<8x32xf32>, vector<8x32xf32> -> vector<8x32xf32>
    %54 = arith.addf %34, %53 : vector<8x32xf32>
    %55 = vector.extract_strided_slice %31 {offsets = [0, 8], sizes = [8, 8], strides = [1, 1]} : vector<8x32xf32> to vector<8x8xf32>
    %56 = vector.extract_strided_slice %32 {offsets = [0, 8], sizes = [8, 8], strides = [1, 1]} : vector<8x32xf32> to vector<8x8xf32>
    %57 = vector.extract_strided_slice %33 {offsets = [0, 8], sizes = [8, 8], strides = [1, 1]} : vector<8x32xf32> to vector<8x8xf32>
    %58 = tpu.transpose %56, [1, 0] : vector<8x8xf32> -> vector<8x8xf32>
    %cst_24 = arith.constant dense<0.000000e+00> : vector<8x8xf32>
    %59 = tpu.matmul %55, %58, %cst_24 {dimension_numbers = #tpu.dot_dimension_numbers<[1], [0], [0], [1], [0, 0, 1, 1], [], []>} : vector<8x8xf32>, vector<8x8xf32>, vector<8x8xf32> -> vector<8x8xf32>
    %cst_25 = arith.constant 0.353553385 : f32
    %60 = vector.broadcast %cst_25 : f32 to vector<8x8xf32>
    %61 = arith.mulf %59, %60 : vector<8x8xf32>
    %cst_26 = arith.constant dense<0xFF800000> : vector<8xf32>
    %62 = vector.multi_reduction <maximumf>, %61, %cst_26 [1] : vector<8x8xf32> to vector<8xf32>
    %63 = vector.shape_cast %62 : vector<8xf32> to vector<8x1xf32>
    %64 = vector.broadcast %63 : vector<8x1xf32> to vector<8x8xf32>
    %65 = arith.subf %61, %64 : vector<8x8xf32>
    %66 = math.exp %65 : vector<8x8xf32>
    %cst_27 = arith.constant dense<0.000000e+00> : vector<8xf32>
    %67 = vector.multi_reduction <add>, %66, %cst_27 [1] : vector<8x8xf32> to vector<8xf32>
    %68 = vector.shape_cast %67 : vector<8xf32> to vector<8x1xf32>
    %69 = vector.broadcast %68 : vector<8x1xf32> to vector<8x8xf32>
    %70 = arith.divf %66, %69 : vector<8x8xf32>
    %cst_28 = arith.constant dense<0.000000e+00> : vector<8x8xf32>
    %71 = tpu.matmul %70, %57, %cst_28 {dimension_numbers = #tpu.dot_dimension_numbers<[1], [0], [0], [1], [0, 0, 1, 1], [], []>} : vector<8x8xf32>, vector<8x8xf32>, vector<8x8xf32> -> vector<8x8xf32>
    %c8 = arith.constant 8 : index
    %c0_29 = arith.constant 0 : index
    %72 = vector.load %arg6[%c8, %c0_29] : memref<32x32xf32, #tpu.memory_space<vmem>>, vector<8x32xf32>
    %cst_30 = arith.constant dense<0.000000e+00> : vector<8x32xf32>
    %73 = tpu.matmul %71, %72, %cst_30 {dimension_numbers = #tpu.dot_dimension_numbers<[1], [0], [0], [1], [0, 0, 1, 1], [], []>} : vector<8x8xf32>, vector<8x32xf32>, vector<8x32xf32> -> vector<8x32xf32>
    %74 = arith.addf %54, %73 : vector<8x32xf32>
    %75 = vector.extract_strided_slice %31 {offsets = [0, 16], sizes = [8, 8], strides = [1, 1]} : vector<8x32xf32> to vector<8x8xf32>
    %76 = vector.extract_strided_slice %32 {offsets = [0, 16], sizes = [8, 8], strides = [1, 1]} : vector<8x32xf32> to vector<8x8xf32>
    %77 = vector.extract_strided_slice %33 {offsets = [0, 16], sizes = [8, 8], strides = [1, 1]} : vector<8x32xf32> to vector<8x8xf32>
    %78 = tpu.transpose %76, [1, 0] : vector<8x8xf32> -> vector<8x8xf32>
    %cst_31 = arith.constant dense<0.000000e+00> : vector<8x8xf32>
    %79 = tpu.matmul %75, %78, %cst_31 {dimension_numbers = #tpu.dot_dimension_numbers<[1], [0], [0], [1], [0, 0, 1, 1], [], []>} : vector<8x8xf32>, vector<8x8xf32>, vector<8x8xf32> -> vector<8x8xf32>
    %cst_32 = arith.constant 0.353553385 : f32
    %80 = vector.broadcast %cst_32 : f32 to vector<8x8xf32>
    %81 = arith.mulf %79, %80 : vector<8x8xf32>
    %cst_33 = arith.constant dense<0xFF800000> : vector<8xf32>
    %82 = vector.multi_reduction <maximumf>, %81, %cst_33 [1] : vector<8x8xf32> to vector<8xf32>
    %83 = vector.shape_cast %82 : vector<8xf32> to vector<8x1xf32>
    %84 = vector.broadcast %83 : vector<8x1xf32> to vector<8x8xf32>
    %85 = arith.subf %81, %84 : vector<8x8xf32>
    %86 = math.exp %85 : vector<8x8xf32>
    %cst_34 = arith.constant dense<0.000000e+00> : vector<8xf32>
    %87 = vector.multi_reduction <add>, %86, %cst_34 [1] : vector<8x8xf32> to vector<8xf32>
    %88 = vector.shape_cast %87 : vector<8xf32> to vector<8x1xf32>
    %89 = vector.broadcast %88 : vector<8x1xf32> to vector<8x8xf32>
    %90 = arith.divf %86, %89 : vector<8x8xf32>
    %cst_35 = arith.constant dense<0.000000e+00> : vector<8x8xf32>
    %91 = tpu.matmul %90, %77, %cst_35 {dimension_numbers = #tpu.dot_dimension_numbers<[1], [0], [0], [1], [0, 0, 1, 1], [], []>} : vector<8x8xf32>, vector<8x8xf32>, vector<8x8xf32> -> vector<8x8xf32>
    %c16 = arith.constant 16 : index
    %c0_36 = arith.constant 0 : index
    %92 = vector.load %arg6[%c16, %c0_36] : memref<32x32xf32, #tpu.memory_space<vmem>>, vector<8x32xf32>
    %cst_37 = arith.constant dense<0.000000e+00> : vector<8x32xf32>
    %93 = tpu.matmul %91, %92, %cst_37 {dimension_numbers = #tpu.dot_dimension_numbers<[1], [0], [0], [1], [0, 0, 1, 1], [], []>} : vector<8x8xf32>, vector<8x32xf32>, vector<8x32xf32> -> vector<8x32xf32>
    %94 = arith.addf %74, %93 : vector<8x32xf32>
    %95 = vector.extract_strided_slice %31 {offsets = [0, 24], sizes = [8, 8], strides = [1, 1]} : vector<8x32xf32> to vector<8x8xf32>
    %96 = vector.extract_strided_slice %32 {offsets = [0, 24], sizes = [8, 8], strides = [1, 1]} : vector<8x32xf32> to vector<8x8xf32>
    %97 = vector.extract_strided_slice %33 {offsets = [0, 24], sizes = [8, 8], strides = [1, 1]} : vector<8x32xf32> to vector<8x8xf32>
    %98 = tpu.transpose %96, [1, 0] : vector<8x8xf32> -> vector<8x8xf32>
    %cst_38 = arith.constant dense<0.000000e+00> : vector<8x8xf32>
    %99 = tpu.matmul %95, %98, %cst_38 {dimension_numbers = #tpu.dot_dimension_numbers<[1], [0], [0], [1], [0, 0, 1, 1], [], []>} : vector<8x8xf32>, vector<8x8xf32>, vector<8x8xf32> -> vector<8x8xf32>
    %cst_39 = arith.constant 0.353553385 : f32
    %100 = vector.broadcast %cst_39 : f32 to vector<8x8xf32>
    %101 = arith.mulf %99, %100 : vector<8x8xf32>
    %cst_40 = arith.constant dense<0xFF800000> : vector<8xf32>
    %102 = vector.multi_reduction <maximumf>, %101, %cst_40 [1] : vector<8x8xf32> to vector<8xf32>
    %103 = vector.shape_cast %102 : vector<8xf32> to vector<8x1xf32>
    %104 = vector.broadcast %103 : vector<8x1xf32> to vector<8x8xf32>
    %105 = arith.subf %101, %104 : vector<8x8xf32>
    %106 = math.exp %105 : vector<8x8xf32>
    %cst_41 = arith.constant dense<0.000000e+00> : vector<8xf32>
    %107 = vector.multi_reduction <add>, %106, %cst_41 [1] : vector<8x8xf32> to vector<8xf32>
    %108 = vector.shape_cast %107 : vector<8xf32> to vector<8x1xf32>
    %109 = vector.broadcast %108 : vector<8x1xf32> to vector<8x8xf32>
    %110 = arith.divf %106, %109 : vector<8x8xf32>
    %cst_42 = arith.constant dense<0.000000e+00> : vector<8x8xf32>
    %111 = tpu.matmul %110, %97, %cst_42 {dimension_numbers = #tpu.dot_dimension_numbers<[1], [0], [0], [1], [0, 0, 1, 1], [], []>} : vector<8x8xf32>, vector<8x8xf32>, vector<8x8xf32> -> vector<8x8xf32>
    %c24 = arith.constant 24 : index
    %c0_43 = arith.constant 0 : index
    %112 = vector.load %arg6[%c24, %c0_43] : memref<32x32xf32, #tpu.memory_space<vmem>>, vector<8x32xf32>
    %cst_44 = arith.constant dense<0.000000e+00> : vector<8x32xf32>
    %113 = tpu.matmul %111, %112, %cst_44 {dimension_numbers = #tpu.dot_dimension_numbers<[1], [0], [0], [1], [0, 0, 1, 1], [], []>} : vector<8x8xf32>, vector<8x32xf32>, vector<8x32xf32> -> vector<8x32xf32>
    %114 = arith.addf %94, %113 : vector<8x32xf32>
    %115 = arith.addf %1, %114 : vector<8x32xf32>
    %c0_45 = arith.constant 0 : index
    %c0_46 = arith.constant 0 : index
    %116 = vector.load %arg7[%c0_45, %c0_46] : memref<1x32xf32, #tpu.memory_space<vmem>>, vector<1x32xf32>
    %117 = vector.broadcast %116 : vector<1x32xf32> to vector<8x32xf32>
    %118 = arith.addf %115, %117 : vector<8x32xf32>
    %c0_47 = arith.constant 0 : index
    %c0_48 = arith.constant 0 : index
    %c0_49 = arith.constant 0 : index
    %119 = vector.load %arg8[%c0_47, %c0_48, %c0_49] : memref<1x8x32xf32, #tpu.memory_space<vmem>>, vector<1x8x32xf32>
    %120 = vector.shape_cast %119 : vector<1x8x32xf32> to vector<8x32xf32>
    %121 = vector.shape_cast %118 : vector<8x32xf32> to vector<1x8x32xf32>
    tpu.vector_store %arg8[%c0_47, %c0_48, %c0_49], %121 {strides = array<i32>} : memref<1x8x32xf32, #tpu.memory_space<vmem>>, vector<1x8x32xf32>,
    return
  }
  func.func @transform_0(%arg0: i32) -> (i32, i32, i32) {
    %c0_i32 = arith.constant 0 : i32
    %c0_i32_0 = arith.constant 0 : i32
    %c0_i32_1 = arith.constant 0 : i32
    return %arg0, %c0_i32, %c0_i32_0 : i32, i32, i32
  }
  func.func @transform_1(%arg0: i32) -> (i32, i32) {
    %c0_i32 = arith.constant 0 : i32
    %c0_i32_0 = arith.constant 0 : i32
    %c0_i32_1 = arith.constant 0 : i32
    return %c0_i32, %c0_i32_0 : i32, i32
  }
  func.func @transform_2(%arg0: i32) -> (i32, i32) {
    %c0_i32 = arith.constant 0 : i32
    %c0_i32_0 = arith.constant 0 : i32
    %c0_i32_1 = arith.constant 0 : i32
    return %c0_i32, %c0_i32_0 : i32, i32
  }
  func.func @transform_3(%arg0: i32) -> (i32, i32) {
    %c0_i32 = arith.constant 0 : i32
    %c0_i32_0 = arith.constant 0 : i32
    %c0_i32_1 = arith.constant 0 : i32
    return %c0_i32, %c0_i32_0 : i32, i32
  }
  func.func @transform_4(%arg0: i32) -> (i32, i32) {
    %c0_i32 = arith.constant 0 : i32
    %c0_i32_0 = arith.constant 0 : i32
    %c0_i32_1 = arith.constant 0 : i32
    return %c0_i32, %c0_i32_0 : i32, i32
  }
  func.func @transform_5(%arg0: i32) -> (i32, i32) {
    %c0_i32 = arith.constant 0 : i32
    %c0_i32_0 = arith.constant 0 : i32
    %c0_i32_1 = arith.constant 0 : i32
    return %c0_i32, %c0_i32_0 : i32, i32
  }
  func.func @transform_6(%arg0: i32) -> (i32, i32) {
    %c0_i32 = arith.constant 0 : i32
    %c0_i32_0 = arith.constant 0 : i32
    %c0_i32_1 = arith.constant 0 : i32
    return %c0_i32, %c0_i32_0 : i32, i32
  }
  func.func @transform_7(%arg0: i32) -> (i32, i32, i32) {
    %c0_i32 = arith.constant 0 : i32
    %c0_i32_0 = arith.constant 0 : i32
    %c0_i32_1 = arith.constant 0 : i32
    return %arg0, %c0_i32, %c0_i32_0 : i32, i32, i32
  }
}

</mosaic_0001>

<llo_original>
// kernel: transformer_block.3
$region0: #{transformer_block.3}
  #allocation0 [shape = 'u32[]', space=smem, size = 0x4, offset = 0x4, fixed_abs, tag = 'smem constant byte address 0x4 - core index']
  #allocation1 [shape = 'u32[144,128]{1,0:T(1,128)}', space=vmem, size = 0x12000, scoped, tag = 'internal scratch']
  %s0 = inlined_call_operand.vmem [shape: f32[16,32], index: 0, kind: input, shape index: {}]
  %s1 = inlined_call_operand.vmem [shape: f32[1,32], index: 1, kind: input, shape index: {}]
  %s2 = inlined_call_operand.vmem [shape: f32[1,32], index: 2, kind: input, shape index: {}]
  %s3 = inlined_call_operand.vmem [shape: f32[32,128], index: 3, kind: input, shape index: {}]
  %s4 = inlined_call_operand.vmem [shape: f32[1,128], index: 4, kind: input, shape index: {}]
  %s5 = inlined_call_operand.vmem [shape: f32[128,32], index: 5, kind: input, shape index: {}]
  %s6 = inlined_call_operand.vmem [shape: f32[1,32], index: 6, kind: input, shape index: {}]
  %s7 = inlined_call_operand.vmem [shape: f32[16,32], index: 7, kind: output, shape index: {}]
  %s8 = sld [smem:[#allocation0]]
  $region38: #{transformer_block.3} parent=0
    _
  %s10 = ssub.s32 1, %s8
  %s11 = scalar_select 0, %s10, %s8
  // Predicated region
  $region2: #{transformer_block.3} parent=0 // pred_check
    _
  $region3: #{transformer_block.3} parent=0 // pred_check_branch
    %13 = sbr.rel (0) target = $region5
  $region4: #{transformer_block.3} parent=0 // pred_region
    _
  $region5: #{transformer_block.3} parent=0 // pred_fallthru
    _
  // Predicated region
  $region6: #{transformer_block.3} parent=0 // pred_check
    _
  $region7: #{transformer_block.3} parent=0 // pred_check_branch
    %15 = sbr.rel (0) target = $region9
  $region8: #{transformer_block.3} parent=0 // pred_region
    _
  $region9: #{transformer_block.3} parent=0 // pred_fallthru
    _
  // Predicated region
  $region10: #{transformer_block.3} parent=0 // pred_check
    _
  $region11: #{transformer_block.3} parent=0 // pred_check_branch
    %17 = sbr.rel (0) target = $region13
  $region12: #{transformer_block.3} parent=0 // pred_region
    _
  $region13: #{transformer_block.3} parent=0 // pred_fallthru
    _
  // Predicated region
  $region14: #{transformer_block.3} parent=0 // pred_check
    _
  $region15: #{transformer_block.3} parent=0 // pred_check_branch
    %19 = sbr.rel (0) target = $region17
  $region16: #{transformer_block.3} parent=0 // pred_region
    _
  $region17: #{transformer_block.3} parent=0 // pred_fallthru
    _
  // Predicated region
  $region18: #{transformer_block.3} parent=0 // pred_check
    _
  $region19: #{transformer_block.3} parent=0 // pred_check_branch
    %21 = sbr.rel (0) target = $region21
  $region20: #{transformer_block.3} parent=0 // pred_region
    _
  $region21: #{transformer_block.3} parent=0 // pred_fallthru
    _
  // Predicated region
  $region22: #{transformer_block.3} parent=0 // pred_check
    _
  $region23: #{transformer_block.3} parent=0 // pred_check_branch
    %23 = sbr.rel (0) target = $region25
  $region24: #{transformer_block.3} parent=0 // pred_region
    _
  $region25: #{transformer_block.3} parent=0 // pred_fallthru
    _
  // Predicated region
  $region26: #{transformer_block.3} parent=0 // pred_check
    _
  $region27: #{transformer_block.3} parent=0 // pred_check_branch
    %25 = sbr.rel (0) target = $region29
  $region28: #{transformer_block.3} parent=0 // pred_region
    _
  $region29: #{transformer_block.3} parent=0 // pred_fallthru
    _
  %v26 = vld [vmem:[%s0] sm:$0xff]
  %v27 = vld [vmem:[%s0 + $0x8] sm:$0xff]
  %v28 = vld [vmem:[%s1] sm:$0x1]
  %v29 = vld [vmem:[%s2] sm:$0x1]
  %vm30 = vcmask 261120
  %v31 = vsel %vm30, %v26, 0.0
  %32 = vadd.xlane.f32.xlu0 %v31
  %v33 = vpop.xlane.xlu0 %32
  %v34 = vsel %vm30, %v27, 0.0
  %35 = vadd.xlane.f32.xlu0 %v34
  %v36 = vpop.xlane.xlu0 %35
  %v37 = vrcp.pop 32.0
  %v38 = vmul.f32 %v33, %v37
  %v39 = vmul.f32 %v36, %v37
  %v40 = vsub.f32 %v26, %v38
  %v41 = vsub.f32 %v27, %v39
  %v42 = vmul.f32 %v40, %v40
  %v43 = vmul.f32 %v41, %v41
  %v44 = vsel %vm30, %v42, 0.0
  %45 = vadd.xlane.f32.xlu0 %v44
  %v46 = vpop.xlane.xlu0 %45
  %v47 = vsel %vm30, %v43, 0.0
  %48 = vadd.xlane.f32.xlu0 %v47
  %v49 = vpop.xlane.xlu0 %48
  %v50 = vmul.f32 %v46, %v37
  %v51 = vmul.f32 %v49, %v37
  %v52 = vadd.f32 %v50, 1e-05
  %v53 = vadd.f32 %v51, 1e-05
  %v54 = vrsqrt.pop %v52
  %v55 = vrsqrt.pop %v53
  %v56 = vmul.f32 %v40, %v54
  %v57 = vmul.f32 %v41, %v55
  %v59 = vlaneseq
  %v60 = vshrl.u32 %v59, 7
  %v61 = vsub.s32 0, %v60
  %v62 = vrot.slane %v28, %v61
  %v64 = vmul.f32 %v56, %v62
  %v65 = vmul.f32 %v57, %v62
  %v67 = vlaneseq
  %v68 = vshrl.u32 %v67, 7
  %v69 = vsub.s32 0, %v68
  %v70 = vrot.slane %v29, %v69
  %v72 = vadd.f32 %v64, %v70
  %v73 = vadd.f32 %v65, %v70
  %v74 = vld [vmem:[%s3] sm:$0xff]
  %v75 = vld [vmem:[%s3 + $0x8] sm:$0xff]
  %v76 = vld [vmem:[%s3 + $0x10] sm:$0xff]
  %v77 = vld [vmem:[%s3 + $0x18] sm:$0xff]
  %v78 = vld [vmem:[%s4] sm:$0x1]
  %v80 = vlaneseq
  %v81 = vshrl.u32 %v80, 7
  %v82 = vsub.s32 0, %v81
  %v83 = vrot.slane %v78, %v82
  %v86 = vsel %vm30, %v72, 0
  %v89 = vsel %vm30, %v73, 0
  %91 = vmatprep.subr.mxu0 0.0
  %92 = vmatpush1.msra.mxu0 %v74
  %93 = vmatprep.subr.mxu0 0.0
  %94 = vmatpush1.msra.mxu0 %v75
  %95 = vmatprep.subr.mxu0 0.0
  %96 = vmatpush1.msra.mxu0 %v76
  %97 = vmatprep.subr.mxu0 0.0
  %98 = vmatpush1.msra.mxu0 %v77
  %99 = vmatprep.subr.mxu0 0.0
  %100 = vmatpush1.msra.mxu0 0.0
  %101 = vmatprep.subr.mxu0 0.0
  %102 = vmatpush1.msra.mxu0 0.0
  %103 = vmatprep.subr.mxu0 0.0
  %104 = vmatpush1.msra.mxu0 0.0
  %105 = vmatprep.subr.mxu0 0.0
  %106 = vmatpush1.msra.mxu0 0.0
  %107 = vmatprep.subr.mxu0 0.0
  %108 = vmatpush1.msra.mxu0 0.0
  %109 = vmatprep.subr.mxu0 0.0
  %110 = vmatpush1.msra.mxu0 0.0
  %111 = vmatprep.subr.mxu0 0.0
  %112 = vmatpush1.msra.mxu0 0.0
  %113 = vmatprep.subr.mxu0 0.0
  %114 = vmatpush1.msra.mxu0 0.0
  %115 = vmatprep.subr.mxu0 0.0
  %116 = vmatpush1.msra.mxu0 0.0
  %117 = vmatprep.subr.mxu0 0.0
  %118 = vmatpush1.msra.mxu0 0.0
  %119 = vmatprep.subr.mxu0 0.0
  %120 = vmatpush1.msra.mxu0 0.0
  %121 = vmatprep.subr.mxu0 0.0
  %122 = vmatpush1.msra.mxu0 0.0
  %123 = vmatprep.subr.mxu0 0.0
  %124 = vmatpush1.msra.mxu0 0.0
  %125 = vmatprep.subr.mxu0 0.0
  %126 = vmatpush1.msra.mxu0 0.0
  %127 = vmatprep.subr.mxu0 0.0
  %128 = vmatpush1.msra.mxu0 0.0
  %129 = vmatprep.subr.mxu0 0.0
  %130 = vmatpush1.msra.mxu0 0.0
  %131 = vmatprep.subr.mxu0 0.0
  %132 = vmatpush1.msra.mxu0 0.0
  %133 = vmatprep.subr.mxu0 0.0
  %134 = vmatpush1.msra.mxu0 0.0
  %135 = vmatprep.subr.mxu0 0.0
  %136 = vmatpush1.msra.mxu0 0.0
  %137 = vmatprep.subr.mxu0 0.0
  %138 = vmatpush1.msra.mxu0 0.0
  %139 = vmatprep.subr.mxu0 0.0
  %140 = vmatpush1.msra.mxu0 0.0
  %141 = vmatprep.subr.mxu0 0.0
  %142 = vmatpush1.msra.mxu0 0.0
  %143 = vmatprep.subr.mxu0 0.0
  %144 = vmatpush1.msra.mxu0 0.0
  %145 = vmatprep.subr.mxu0 0.0
  %146 = vmatpush1.msra.mxu0 0.0
  %147 = vmatprep.subr.mxu0 0.0
  %148 = vmatpush1.msra.mxu0 0.0
  %149 = vmatprep.subr.mxu0 0.0
  %150 = vmatpush1.msra.mxu0 0.0
  %151 = vmatprep.subr.mxu0 0.0
  %152 = vmatpush1.msra.mxu0 0.0
  %153 = vmatprep.subr.mxu0 0.0
  %154 = vmatpush1.msra.mxu0 0.0
  %155 = vmatprep.mubr.f32.mxu0 0.0
  %156 = vmatmul.mubr.f32.gmra.mrb[0].mxu0 %v86
  %v157 = vpop.f32.mrb[0].mxu0
  %v158 = vadd.f32 %v83, %v157
  %v159 = vpop.f32.mrb[0].mxu0
  %160 = vmatprep.mubr.f32.mxu0 0.0
  %161 = vmatmul.mubr.f32.gmra.mrb[0].mxu0 %v89
  %v162 = vpop.f32.mrb[0].mxu0
  %v163 = vadd.f32 %v83, %v162
  %v164 = vpop.f32.mrb[0].mxu0
  %165 = vdwg.mxu0
  %v166 = vmax.f32 %v158, 0.0
  %v167 = vmax.f32 %v163, 0.0
  %v168 = vld [vmem:[%s5] sm:$0xff]
  %v169 = vld [vmem:[%s5 + $0x8] sm:$0xff]
  %v170 = vld [vmem:[%s5 + $0x10] sm:$0xff]
  %v171 = vld [vmem:[%s5 + $0x18] sm:$0xff]
  %v172 = vld [vmem:[%s5 + $0x20] sm:$0xff]
  %v173 = vld [vmem:[%s5 + $0x28] sm:$0xff]
  %v174 = vld [vmem:[%s5 + $0x30] sm:$0xff]
  %v175 = vld [vmem:[%s5 + $0x38] sm:$0xff]
  %v176 = vld [vmem:[%s5 + $0x40] sm:$0xff]
  %v177 = vld [vmem:[%s5 + $0x48] sm:$0xff]
  %v178 = vld [vmem:[%s5 + $0x50] sm:$0xff]
  %v179 = vld [vmem:[%s5 + $0x58] sm:$0xff]
  %v180 = vld [vmem:[%s5 + $0x60] sm:$0xff]
  %v181 = vld [vmem:[%s5 + $0x68] sm:$0xff]
  %v182 = vld [vmem:[%s5 + $0x70] sm:$0xff]
  %v183 = vld [vmem:[%s5 + $0x78] sm:$0xff]
  %v184 = vld [vmem:[%s6] sm:$0x1]
  %v186 = vlaneseq
  %v187 = vshrl.u32 %v186, 7
  %v188 = vsub.s32 0, %v187
  %v189 = vrot.slane %v184, %v188
  %191 = vmatprep.subr.mxu0 0.0
  %192 = vmatpush1.msra.mxu0 %v168
  %193 = vmatprep.subr.mxu0 0.0
  %194 = vmatpush1.msra.mxu0 %v169
  %195 = vmatprep.subr.mxu0 0.0
  %196 = vmatpush1.msra.mxu0 %v170
  %197 = vmatprep.subr.mxu0 0.0
  %198 = vmatpush1.msra.mxu0 %v171
  %199 = vmatprep.subr.mxu0 0.0
  %200 = vmatpush1.msra.mxu0 %v172
  %201 = vmatprep.subr.mxu0 0.0
  %202 = vmatpush1.msra.mxu0 %v173
  %203 = vmatprep.subr.mxu0 0.0
  %204 = vmatpush1.msra.mxu0 %v174
  %205 = vmatprep.subr.mxu0 0.0
  %206 = vmatpush1.msra.mxu0 %v175
  %207 = vmatprep.subr.mxu0 0.0
  %208 = vmatpush1.msra.mxu0 %v176
  %209 = vmatprep.subr.mxu0 0.0
  %210 = vmatpush1.msra.mxu0 %v177
  %211 = vmatprep.subr.mxu0 0.0
  %212 = vmatpush1.msra.mxu0 %v178
  %213 = vmatprep.subr.mxu0 0.0
  %214 = vmatpush1.msra.mxu0 %v179
  %215 = vmatprep.subr.mxu0 0.0
  %216 = vmatpush1.msra.mxu0 %v180
  %217 = vmatprep.subr.mxu0 0.0
  %218 = vmatpush1.msra.mxu0 %v181
  %219 = vmatprep.subr.mxu0 0.0
  %220 = vmatpush1.msra.mxu0 %v182
  %221 = vmatprep.subr.mxu0 0.0
  %222 = vmatpush1.msra.mxu0 %v183
  %223 = vmatprep.subr.mxu0 0.0
  %224 = vmatpush1.msra.mxu0 0.0
  %225 = vmatprep.subr.mxu0 0.0
  %226 = vmatpush1.msra.mxu0 0.0
  %227 = vmatprep.subr.mxu0 0.0
  %228 = vmatpush1.msra.mxu0 0.0
  %229 = vmatprep.subr.mxu0 0.0
  %230 = vmatpush1.msra.mxu0 0.0
  %231 = vmatprep.subr.mxu0 0.0
  %232 = vmatpush1.msra.mxu0 0.0
  %233 = vmatprep.subr.mxu0 0.0
  %234 = vmatpush1.msra.mxu0 0.0
  %235 = vmatprep.subr.mxu0 0.0
  %236 = vmatpush1.msra.mxu0 0.0
  %237 = vmatprep.subr.mxu0 0.0
  %238 = vmatpush1.msra.mxu0 0.0
  %239 = vmatprep.subr.mxu0 0.0
  %240 = vmatpush1.msra.mxu0 0.0
  %241 = vmatprep.subr.mxu0 0.0
  %242 = vmatpush1.msra.mxu0 0.0
  %243 = vmatprep.subr.mxu0 0.0
  %244 = vmatpush1.msra.mxu0 0.0
  %245 = vmatprep.subr.mxu0 0.0
  %246 = vmatpush1.msra.mxu0 0.0
  %247 = vmatprep.subr.mxu0 0.0
  %248 = vmatpush1.msra.mxu0 0.0
  %249 = vmatprep.subr.mxu0 0.0
  %250 = vmatpush1.msra.mxu0 0.0
  %251 = vmatprep.subr.mxu0 0.0
  %252 = vmatpush1.msra.mxu0 0.0
  %253 = vmatprep.subr.mxu0 0.0
  %254 = vmatpush1.msra.mxu0 0.0
  %255 = vmatprep.mubr.f32.mxu0 0.0
  %256 = vmatmul.mubr.f32.gmra.mrb[0].mxu0 %v166
  %v257 = vpop.f32.mrb[0].mxu0
  %v258 = vadd.f32 %v189, %v257
  %v259 = vpop.f32.mrb[0].mxu0
  %260 = vmatprep.mubr.f32.mxu0 0.0
  %261 = vmatmul.mubr.f32.gmra.mrb[0].mxu0 %v167
  %v262 = vpop.f32.mrb[0].mxu0
  %v263 = vadd.f32 %v189, %v262
  %v264 = vpop.f32.mrb[0].mxu0
  %265 = vdwg.mxu0
  %v266 = vadd.f32 %v26, %v258
  %v267 = vadd.f32 %v27, %v263
  %268 = vst.msk [vmem:[%s7] sm:$0xff] %vm30, %v266
  %269 = vst.msk [vmem:[%s7 + $0x8] sm:$0xff] %vm30, %v267
  // Predicated region
  $region30: #{transformer_block.3} parent=0 // pred_check
    _
  $region31: #{transformer_block.3} parent=0 // pred_check_branch
    %271 = sbr.rel (0) target = $region33
  $region32: #{transformer_block.3} parent=0 // pred_region
    _
  $region33: #{transformer_block.3} parent=0 // pred_fallthru
    _
  // Predicated region
  $region34: #{transformer_block.3} parent=0 // pred_check
    _
  $region35: #{transformer_block.3} parent=0 // pred_check_branch
    %273 = sbr.rel (0) target = $region37
  $region36: #{transformer_block.3} parent=0 // pred_region
    _
  $region37: #{transformer_block.3} parent=0 // pred_fallthru
    _

// kernel: transformer_block.2
$region0: #{transformer_block.2}
  #allocation0 [shape = 'u32[]', space=smem, size = 0x4, offset = 0x4, fixed_abs, tag = 'smem constant byte address 0x4 - core index']
  #allocation1 [shape = 'u32[144,128]{1,0:T(1,128)}', space=vmem, size = 0x12000, scoped, tag = 'internal scratch']
  %s0 = inlined_call_operand.vmem [shape: f32[2,8,32], index: 0, kind: input, shape index: {}]
  %s1 = inlined_call_operand.vmem [shape: f32[1,32], index: 1, kind: input, shape index: {}]
  %s2 = inlined_call_operand.vmem [shape: f32[1,32], index: 2, kind: input, shape index: {}]
  %s3 = inlined_call_operand.vmem [shape: f32[32,96], index: 3, kind: input, shape index: {}]
  %s4 = inlined_call_operand.hbm [shape: f32[1,96], index: 4, kind: input, shape index: {}]
  %s5 = inlined_call_operand.vmem [shape: f32[32,32], index: 5, kind: input, shape index: {}]
  %s6 = inlined_call_operand.hbm [shape: f32[1,32], index: 6, kind: input, shape index: {}]
  %s7 = inlined_call_operand.vmem [shape: f32[2,8,32], index: 7, kind: output, shape index: {}]
  %s8 = sld [smem:[#allocation0]]
  $region69: #{transformer_block.2} parent=0
    _
  %s10 = ssub.s32 1, %s8
  %s11 = scalar_select 0, %s10, %s8
  $region1: #{transformer_block.2} parent=0
    #allocation2 [shape = 'u8[512]{0}', space=vmem, size = 0x400, scoped, tag = 'input window, operand 4, single buffered']
    #allocation3 [shape = 's32[2]{0}', space=sflag, size = 0x8, scoped, tag = 'scoped memory for transformer_block.2']
    #allocation4 [shape = 'u8[512]{0}', space=vmem, size = 0x400, scoped, tag = 'input window, operand 6, single buffered']
    #allocation5 [shape = 's32[1]{0}', space=sflag, size = 0x4, scoped, tag = 'scoped memory for transformer_block.2']
    %12 = vsyncpa [#allocation3], 0
    %13 = vsyncpa [#allocation5], 0
    loop: start=0, step=1, limit=4
    $region2: #{transformer_block.2} parent=1 // loop_pre_header
      _
    $region3: #{transformer_block.2} parent=1 // loop_header
      %s15 = sphi 0, %s19
      %p16 = scmp.ge.s32.totalorder %s15, 4
      %s25 = sphi 0, %s27
      %s28 = sphi 0, %s25
      %s29 = sphi 0, %s28
      %s45 = sphi 0, %s29
      %s49 = sphi 0, %s49
      %s51 = sphi 0, %s49
      %s52 = sphi 0, %s51
      %s66 = sphi 0, %s52
      %s70 = sphi 0, %s70
      %s72 = sphi 0, %s70
      %s73 = sphi 0, %s72
      %s87 = sphi 0, %s73
      %s91 = sphi 0, %s91
      %s93 = sphi 0, %s91
      %s94 = sphi 0, %s93
      %s108 = sphi 0, %s94
      %s112 = sphi 0, %s112
      %s114 = sphi 0, %s112
      %s115 = sphi 0, %s114
      %s129 = sphi 0, %s115
      %s133 = sphi 0, %s133
      %s135 = sphi 0, %s133
      %s136 = sphi 0, %s135
      %s150 = sphi 0, %s136
      %s154 = sphi 0, %s154
      %s156 = sphi 0, %s154
      %s157 = sphi 0, %s156
      %s171 = sphi 0, %s157
      %s177 = sphi 0, %s179
      %s180 = sphi 0, %s177
      %s181 = sphi 0, %s180
      %s197 = sphi 0, %s181
    $region4: #{transformer_block.2} parent=1 // loop_header_branch
      %18 = sbr.rel (%p16) target = $region8
    $region5: #{transformer_block.2} parent=1 // loop_body
      %s20 = ssub.s32 %s15, 1
      %s21 = ssub.s32 %s15, 2
      %s22 = sadd.s32 %s15, 1
      %s23 = ssub.s32 %s15, %s22
      %p24 = scmp.eq.s32.totalorder %s23, 0
      %s26 = sadd.s32 %s25, 1
      %s27 = scalar_select %p24, %s25, %s26
      %p30 = pneg %p24
      %p31 = scmp.eq.s32.totalorder %s15, 1
      %p32 = por %p30, %p31
      %p33 = scmp.ne.s32.totalorder %s25, %s28
      %p34 = scmp.eq.s32.totalorder %s15, 0
      %p35 = por %p33, %p34
      %p36 = scmp.ne.s32.totalorder %s25, %s28
      %p37 = scmp.eq.s32.totalorder %s20, 1
      %p38 = por %p36, %p37
      %p39 = scmp.ne.s32.totalorder %s28, %s29
      %p40 = scmp.eq.s32.totalorder %s20, 0
      %p41 = por %p39, %p40
      %p42 = scmp.ne.s32.totalorder %s28, %s29
      %p43 = scmp.eq.s32.totalorder %s21, 1
      %p44 = por %p42, %p43
      %p46 = scmp.ne.s32.totalorder %s29, %s45
      %p47 = scmp.eq.s32.totalorder %s21, 0
      %p48 = por %p46, %p47
      %s50 = sadd.s32 %s49, 1
      %p53 = scmp.eq.s32.totalorder %s15, 1
      %p54 = scmp.ne.s32.totalorder %s49, %s51
      %p55 = scmp.eq.s32.totalorder %s15, 0
      %p56 = por %p54, %p55
      %p57 = scmp.ne.s32.totalorder %s49, %s51
      %p58 = scmp.eq.s32.totalorder %s20, 1
      %p59 = por %p57, %p58
      %p60 = scmp.ne.s32.totalorder %s51, %s52
      %p61 = scmp.eq.s32.totalorder %s20, 0
      %p62 = por %p60, %p61
      %p63 = scmp.ne.s32.totalorder %s51, %s52
      %p64 = scmp.eq.s32.totalorder %s21, 1
      %p65 = por %p63, %p64
      %p67 = scmp.ne.s32.totalorder %s52, %s66
      %p68 = scmp.eq.s32.totalorder %s21, 0
      %p69 = por %p67, %p68
      %s71 = sadd.s32 %s70, 1
      %p74 = scmp.eq.s32.totalorder %s15, 1
      %p75 = scmp.ne.s32.totalorder %s70, %s72
      %p76 = scmp.eq.s32.totalorder %s15, 0
      %p77 = por %p75, %p76
      %p78 = scmp.ne.s32.totalorder %s70, %s72
      %p79 = scmp.eq.s32.totalorder %s20, 1
      %p80 = por %p78, %p79
      %p81 = scmp.ne.s32.totalorder %s72, %s73
      %p82 = scmp.eq.s32.totalorder %s20, 0
      %p83 = por %p81, %p82
      %p84 = scmp.ne.s32.totalorder %s72, %s73
      %p85 = scmp.eq.s32.totalorder %s21, 1
      %p86 = por %p84, %p85
      %p88 = scmp.ne.s32.totalorder %s73, %s87
      %p89 = scmp.eq.s32.totalorder %s21, 0
      %p90 = por %p88, %p89
      %s92 = sadd.s32 %s91, 1
      %p95 = scmp.eq.s32.totalorder %s15, 1
      %p96 = scmp.ne.s32.totalorder %s91, %s93
      %p97 = scmp.eq.s32.totalorder %s15, 0
      %p98 = por %p96, %p97
      %p99 = scmp.ne.s32.totalorder %s91, %s93
      %p100 = scmp.eq.s32.totalorder %s20, 1
      %p101 = por %p99, %p100
      %p102 = scmp.ne.s32.totalorder %s93, %s94
      %p103 = scmp.eq.s32.totalorder %s20, 0
      %p104 = por %p102, %p103
      %p105 = scmp.ne.s32.totalorder %s93, %s94
      %p106 = scmp.eq.s32.totalorder %s21, 1
      %p107 = por %p105, %p106
      %p109 = scmp.ne.s32.totalorder %s94, %s108
      %p110 = scmp.eq.s32.totalorder %s21, 0
      %p111 = por %p109, %p110
      %s113 = sadd.s32 %s112, 1
      %p116 = scmp.eq.s32.totalorder %s15, 1
      %p117 = scmp.ne.s32.totalorder %s112, %s114
      %p118 = scmp.eq.s32.totalorder %s15, 0
      %p119 = por %p117, %p118
      %p120 = scmp.ne.s32.totalorder %s112, %s114
      %p121 = scmp.eq.s32.totalorder %s20, 1
      %p122 = por %p120, %p121
      %p123 = scmp.ne.s32.totalorder %s114, %s115
      %p124 = scmp.eq.s32.totalorder %s20, 0
      %p125 = por %p123, %p124
      %p126 = scmp.ne.s32.totalorder %s114, %s115
      %p127 = scmp.eq.s32.totalorder %s21, 1
      %p128 = por %p126, %p127
      %p130 = scmp.ne.s32.totalorder %s115, %s129
      %p131 = scmp.eq.s32.totalorder %s21, 0
      %p132 = por %p130, %p131
      %s134 = sadd.s32 %s133, 1
      %p137 = scmp.eq.s32.totalorder %s15, 1
      %p138 = scmp.ne.s32.totalorder %s133, %s135
      %p139 = scmp.eq.s32.totalorder %s15, 0
      %p140 = por %p138, %p139
      %p141 = scmp.ne.s32.totalorder %s133, %s135
      %p142 = scmp.eq.s32.totalorder %s20, 1
      %p143 = por %p141, %p142
      %p144 = scmp.ne.s32.totalorder %s135, %s136
      %p145 = scmp.eq.s32.totalorder %s20, 0
      %p146 = por %p144, %p145
      %p147 = scmp.ne.s32.totalorder %s135, %s136
      %p148 = scmp.eq.s32.totalorder %s21, 1
      %p149 = por %p147, %p148
      %p151 = scmp.ne.s32.totalorder %s136, %s150
      %p152 = scmp.eq.s32.totalorder %s21, 0
      %p153 = por %p151, %p152
      %s155 = sadd.s32 %s154, 1
      %p158 = scmp.eq.s32.totalorder %s15, 1
      %p159 = scmp.ne.s32.totalorder %s154, %s156
      %p160 = scmp.eq.s32.totalorder %s15, 0
      %p161 = por %p159, %p160
      %p162 = scmp.ne.s32.totalorder %s154, %s156
      %p163 = scmp.eq.s32.totalorder %s20, 1
      %p164 = por %p162, %p163
      %p165 = scmp.ne.s32.totalorder %s156, %s157
      %p166 = scmp.eq.s32.totalorder %s20, 0
      %p167 = por %p165, %p166
      %p168 = scmp.ne.s32.totalorder %s156, %s157
      %p169 = scmp.eq.s32.totalorder %s21, 1
      %p170 = por %p168, %p169
      %p172 = scmp.ne.s32.totalorder %s157, %s171
      %p173 = scmp.eq.s32.totalorder %s21, 0
      %p174 = por %p172, %p173
      %s175 = ssub.s32 %s15, %s22
      %p176 = scmp.eq.s32.totalorder %s175, 0
      %s178 = sadd.s32 %s177, 1
      %s179 = scalar_select %p176, %s177, %s178
      %p182 = pneg %p176
      %p183 = scmp.eq.s32.totalorder %s15, 1
      %p184 = por %p182, %p183
      %p185 = scmp.ne.s32.totalorder %s177, %s180
      %p186 = scmp.eq.s32.totalorder %s15, 0
      %p187 = por %p185, %p186
      %p188 = scmp.ne.s32.totalorder %s177, %s180
      %p189 = scmp.eq.s32.totalorder %s20, 1
      %p190 = por %p188, %p189
      %p191 = scmp.ne.s32.totalorder %s180, %s181
      %p192 = scmp.eq.s32.totalorder %s20, 0
      %p193 = por %p191, %p192
      %p194 = scmp.ne.s32.totalorder %s180, %s181
      %p195 = scmp.eq.s32.totalorder %s21, 1
      %p196 = por %p194, %p195
      %p198 = scmp.ne.s32.totalorder %s181, %s197
      %p199 = scmp.eq.s32.totalorder %s21, 0
      %p200 = por %p198, %p199
      %p201 = scmp.le.s32.totalorder 1, %s15
      %p202 = scmp.lt.s32.totalorder %s15, 3
      %p203 = pnand %p201, %p202
      %p204 = pneg %p203
      // Predicated region
      $region9: #{transformer_block.2} parent=5 // pred_check
        _
      $region10: #{transformer_block.2} parent=5 // pred_check_branch
        %206 = sbr.rel (%p203) target = $region12
      $region11: #{transformer_block.2} parent=5 // pred_region
        %s207 = ssub.s32 %s15, 1
        // Predicated region
        $region13: #{transformer_block.2} parent=11 // pred_check
          %p208 = pneg %p62
        $region14: #{transformer_block.2} parent=11 // pred_check_branch
          %210 = sbr.rel (%p208) target = $region16
        $region15: #{transformer_block.2} parent=11 // pred_region
          _
        $region16: #{transformer_block.2} parent=11 // pred_fallthru
          _
        // Predicated region
        $region17: #{transformer_block.2} parent=11 // pred_check
          %p211 = pneg %p83
        $region18: #{transformer_block.2} parent=11 // pred_check_branch
          %213 = sbr.rel (%p211) target = $region20
        $region19: #{transformer_block.2} parent=11 // pred_region
          _
        $region20: #{transformer_block.2} parent=11 // pred_fallthru
          _
        // Predicated region
        $region21: #{transformer_block.2} parent=11 // pred_check
          %p214 = pneg %p104
        $region22: #{transformer_block.2} parent=11 // pred_check_branch
          %216 = sbr.rel (%p214) target = $region24
        $region23: #{transformer_block.2} parent=11 // pred_region
          _
        $region24: #{transformer_block.2} parent=11 // pred_fallthru
          _
        // Predicated region
        $region25: #{transformer_block.2} parent=11 // pred_check
          %p217 = pneg %p125
        $region26: #{transformer_block.2} parent=11 // pred_check_branch
          %219 = sbr.rel (%p217) target = $region28
        $region27: #{transformer_block.2} parent=11 // pred_region
          %s221 = ssub.s32 16, 16
          %222 = vsyncadd [#allocation3], %s221
          %s224 = sshll.u32 [#allocation2], 4
          %s225 = int_to_ptr.vmem [resolvable:$true] %s224
          %227 = dma.hbm_to_vmem [thread:$0]  %s4, 16, %s225, [#allocation3]
        $region28: #{transformer_block.2} parent=11 // pred_fallthru
          _
        // Predicated region
        $region29: #{transformer_block.2} parent=11 // pred_check
          %p228 = pneg %p146
        $region30: #{transformer_block.2} parent=11 // pred_check_branch
          %230 = sbr.rel (%p228) target = $region32
        $region31: #{transformer_block.2} parent=11 // pred_region
          _
        $region32: #{transformer_block.2} parent=11 // pred_fallthru
          _
        // Predicated region
        $region33: #{transformer_block.2} parent=11 // pred_check
          %p231 = pneg %p167
        $region34: #{transformer_block.2} parent=11 // pred_check_branch
          %233 = sbr.rel (%p231) target = $region36
        $region35: #{transformer_block.2} parent=11 // pred_region
          %s235 = ssub.s32 16, 16
          %236 = vsyncadd [#allocation5], %s235
          %s238 = sshll.u32 [#allocation4], 4
          %s239 = int_to_ptr.vmem [resolvable:$true] %s238
          %241 = dma.hbm_to_vmem [thread:$0]  %s6, 16, %s239, [#allocation5]
        $region36: #{transformer_block.2} parent=11 // pred_fallthru
          _
      $region12: #{transformer_block.2} parent=5 // pred_fallthru
        _
      %p242 = scmp.lt.s32.totalorder %s15, 2
      // Predicated region
      $region37: #{transformer_block.2} parent=5 // pred_check
        %p243 = pneg %p242
      $region38: #{transformer_block.2} parent=5 // pred_check_branch
        %245 = sbr.rel (%p243) target = $region40
      $region39: #{transformer_block.2} parent=5 // pred_region
        // Predicated region
        $region41: #{transformer_block.2} parent=39 // pred_check
          %p246 = pneg %p35
        $region42: #{transformer_block.2} parent=39 // pred_check_branch
          %248 = sbr.rel (%p246) target = $region44
        $region43: #{transformer_block.2} parent=39 // pred_region
          %p249 = scmp.lt.s32.totalorder %s15, 1
          %s250 = scalar_select %p249, %s15, 1
          %s251 = smul.addr %s250, 8
          %s252 = scalar_lea.vmem %s0, %s251
        $region44: #{transformer_block.2} parent=39 // pred_fallthru
          _
      $region40: #{transformer_block.2} parent=5 // pred_fallthru
        _
      %p253 = scmp.le.s32.totalorder 1, %s15
      %p254 = scmp.lt.s32.totalorder %s15, 3
      %p255 = pnand %p253, %p254
      %p256 = pneg %p255
      // Predicated region
      $region45: #{transformer_block.2} parent=5 // pred_check
        _
      $region46: #{transformer_block.2} parent=5 // pred_check_branch
        %258 = sbr.rel (%p255) target = $region48
      $region47: #{transformer_block.2} parent=5 // pred_region
        %s259 = ssub.s32 %s15, 1
        // Predicated region
        $region49: #{transformer_block.2} parent=47 // pred_check
          %p260 = pneg %p125
        $region50: #{transformer_block.2} parent=47 // pred_check_branch
          %262 = sbr.rel (%p260) target = $region52
        $region51: #{transformer_block.2} parent=47 // pred_region
          %263 = dma.done [#allocation3], 16
        $region52: #{transformer_block.2} parent=47 // pred_fallthru
          _
        // Predicated region
        $region53: #{transformer_block.2} parent=47 // pred_check
          %p264 = pneg %p167
        $region54: #{transformer_block.2} parent=47 // pred_check_branch
          %266 = sbr.rel (%p264) target = $region56
        $region55: #{transformer_block.2} parent=47 // pred_region
          %267 = dma.done [#allocation5], 16
        $region56: #{transformer_block.2} parent=47 // pred_fallthru
          _
        %p268 = scmp.lt.s32.totalorder %s20, 1
        %s269 = scalar_select %p268, %s20, 1
        %s270 = smul.addr %s269, 8
        %s271 = scalar_lea.vmem %s0, %s270
        %p272 = pneg %p41
        %p273 = pneg %p38
        %p274 = pneg %p62
        %p275 = pneg %p59
        %p276 = pneg %p83
        %p277 = pneg %p80
        %p278 = pneg %p104
        %p279 = pneg %p101
        %p280 = pneg %p125
        %p281 = pneg %p122
        %p282 = pneg %p146
        %p283 = pneg %p143
        %p284 = pneg %p167
        %p285 = pneg %p164
        %p286 = pneg %p193
        %p287 = pneg %p190
        %p288 = scmp.lt.s32.totalorder %s20, 1
        %s289 = scalar_select %p288, %s20, 1
        %s290 = smul.addr %s289, 8
        %s291 = scalar_lea.vmem %s7, %s290
        %p292 = scmp.lt.s32.totalorder %s20, 1
        %s293 = scalar_select %p292, %s20, 1
        %s294 = smul.addr %s293, 8
        %s295 = scalar_lea.vmem %s0, %s294
        %p296 = scmp.lt.s32.totalorder %s20, 1
        %s297 = scalar_select %p296, %s20, 1
        %s298 = smul.addr %s297, 8
        %s299 = scalar_lea.vmem %s7, %s298
        %v300 = vld [vmem:[%s295] sm:$0xff]
        %v301 = vld [vmem:[%s1] sm:$0x1]
        %v302 = vld [vmem:[%s2] sm:$0x1]
        %vm303 = vcmask 261120
        %v304 = vsel %vm303, %v300, 0.0
        %305 = vadd.xlane.f32.xlu0 %v304
        %v306 = vpop.xlane.xlu0 %305
        %v307 = vrcp.pop 32.0
        %v308 = vmul.f32 %v306, %v307
        %v309 = vsub.f32 %v300, %v308
        %v310 = vmul.f32 %v309, %v309
        %v311 = vsel %vm303, %v310, 0.0
        %312 = vadd.xlane.f32.xlu0 %v311
        %v313 = vpop.xlane.xlu0 %312
        %v314 = vmul.f32 %v313, %v307
        %v315 = vadd.f32 %v314, 1e-05
        %v316 = vrsqrt.pop %v315
        %v317 = vmul.f32 %v309, %v316
        %v319 = vlaneseq
        %v320 = vshrl.u32 %v319, 7
        %v321 = vsub.s32 0, %v320
        %v322 = vrot.slane %v301, %v321
        %v324 = vmul.f32 %v317, %v322
        %v326 = vlaneseq
        %v327 = vshrl.u32 %v326, 7
        %v328 = vsub.s32 0, %v327
        %v329 = vrot.slane %v302, %v328
        %v331 = vadd.f32 %v324, %v329
        %v332 = vld [vmem:[%s3] sm:$0xff]
        %v333 = vld [vmem:[%s3 + $0x8] sm:$0xff]
        %v334 = vld [vmem:[%s3 + $0x10] sm:$0xff]
        %v335 = vld [vmem:[%s3 + $0x18] sm:$0xff]
        %v336 = vld [vmem:[#allocation2] sm:$0x1]
        %v338 = vlaneseq
        %v339 = vshrl.u32 %v338, 7
        %v340 = vsub.s32 0, %v339
        %v341 = vrot.slane %v336, %v340
        %v344 = vsel %vm303, %v331, 0
        %346 = vmatprep.subr.mxu0 0.0
        %347 = vmatpush1.msra.mxu0 %v332
        %348 = vmatprep.subr.mxu0 0.0
        %349 = vmatpush1.msra.mxu0 %v333
        %350 = vmatprep.subr.mxu0 0.0
        %351 = vmatpush1.msra.mxu0 %v334
        %352 = vmatprep.subr.mxu0 0.0
        %353 = vmatpush1.msra.mxu0 %v335
        %354 = vmatprep.subr.mxu0 0.0
        %355 = vmatpush1.msra.mxu0 0.0
        %356 = vmatprep.subr.mxu0 0.0
        %357 = vmatpush1.msra.mxu0 0.0
        %358 = vmatprep.subr.mxu0 0.0
        %359 = vmatpush1.msra.mxu0 0.0
        %360 = vmatprep.subr.mxu0 0.0
        %361 = vmatpush1.msra.mxu0 0.0
        %362 = vmatprep.subr.mxu0 0.0
        %363 = vmatpush1.msra.mxu0 0.0
        %364 = vmatprep.subr.mxu0 0.0
        %365 = vmatpush1.msra.mxu0 0.0
        %366 = vmatprep.subr.mxu0 0.0
        %367 = vmatpush1.msra.mxu0 0.0
        %368 = vmatprep.subr.mxu0 0.0
        %369 = vmatpush1.msra.mxu0 0.0
        %370 = vmatprep.subr.mxu0 0.0
        %371 = vmatpush1.msra.mxu0 0.0
        %372 = vmatprep.subr.mxu0 0.0
        %373 = vmatpush1.msra.mxu0 0.0
        %374 = vmatprep.subr.mxu0 0.0
        %375 = vmatpush1.msra.mxu0 0.0
        %376 = vmatprep.subr.mxu0 0.0
        %377 = vmatpush1.msra.mxu0 0.0
        %378 = vmatprep.subr.mxu0 0.0
        %379 = vmatpush1.msra.mxu0 0.0
        %380 = vmatprep.subr.mxu0 0.0
        %381 = vmatpush1.msra.mxu0 0.0
        %382 = vmatprep.subr.mxu0 0.0
        %383 = vmatpush1.msra.mxu0 0.0
        %384 = vmatprep.subr.mxu0 0.0
        %385 = vmatpush1.msra.mxu0 0.0
        %386 = vmatprep.subr.mxu0 0.0
        %387 = vmatpush1.msra.mxu0 0.0
        %388 = vmatprep.subr.mxu0 0.0
        %389 = vmatpush1.msra.mxu0 0.0
        %390 = vmatprep.subr.mxu0 0.0
        %391 = vmatpush1.msra.mxu0 0.0
        %392 = vmatprep.subr.mxu0 0.0
        %393 = vmatpush1.msra.mxu0 0.0
        %394 = vmatprep.subr.mxu0 0.0
        %395 = vmatpush1.msra.mxu0 0.0
        %396 = vmatprep.subr.mxu0 0.0
        %397 = vmatpush1.msra.mxu0 0.0
        %398 = vmatprep.subr.mxu0 0.0
        %399 = vmatpush1.msra.mxu0 0.0
        %400 = vmatprep.subr.mxu0 0.0
        %401 = vmatpush1.msra.mxu0 0.0
        %402 = vmatprep.subr.mxu0 0.0
        %403 = vmatpush1.msra.mxu0 0.0
        %404 = vmatprep.subr.mxu0 0.0
        %405 = vmatpush1.msra.mxu0 0.0
        %406 = vmatprep.subr.mxu0 0.0
        %407 = vmatpush1.msra.mxu0 0.0
        %408 = vmatprep.subr.mxu0 0.0
        %409 = vmatpush1.msra.mxu0 0.0
        %410 = vmatprep.mubr.f32.mxu0 0.0
        %411 = vmatmul.mubr.f32.gmra.mrb[0].mxu0 %v344
        %v412 = vpop.f32.mrb[0].mxu0
        %v413 = vadd.f32 %v341, %v412
        %v414 = vpop.f32.mrb[0].mxu0
        %415 = vdwg.mxu0
        %417 = vrot.lane.b32.xlu0 %v413, 96
        %v418 = vpop.permute.xlu0 %417
        %vm419 = vcmask 64512
        %v420 = vsel %vm419, %v413, 0
        %v422 = vsel %vm419, %v418, 0
        %424 = vmatprep.subr.mxu0 0.0
        %425 = vmatpush1.xpose.msra.mxu0 %v422
        %426 = vmatprep.subr.mxu0 0.0
        %427 = vmatpush1.xpose.msra.mxu0 0.0
        %428 = vmatprep.subr.mxu0 0.0
        %429 = vmatpush1.xpose.msra.mxu0 0.0
        %430 = vmatprep.subr.mxu0 0.0
        %431 = vmatpush1.xpose.msra.mxu0 0.0
        %432 = vmatprep.subr.mxu0 0.0
        %433 = vmatpush1.xpose.msra.mxu0 0.0
        %434 = vmatprep.subr.mxu0 0.0
        %435 = vmatpush1.xpose.msra.mxu0 0.0
        %436 = vmatprep.subr.mxu0 0.0
        %437 = vmatpush1.xpose.msra.mxu0 0.0
        %438 = vmatprep.subr.mxu0 0.0
        %439 = vmatpush1.xpose.msra.mxu0 0.0
        %440 = vmatprep.subr.mxu0 0.0
        %441 = vmatpush1.xpose.msra.mxu0 0.0
        %442 = vmatprep.subr.mxu0 0.0
        %443 = vmatpush1.xpose.msra.mxu0 0.0
        %444 = vmatprep.subr.mxu0 0.0
        %445 = vmatpush1.xpose.msra.mxu0 0.0
        %446 = vmatprep.subr.mxu0 0.0
        %447 = vmatpush1.xpose.msra.mxu0 0.0
        %448 = vmatprep.subr.mxu0 0.0
        %449 = vmatpush1.xpose.msra.mxu0 0.0
        %450 = vmatprep.subr.mxu0 0.0
        %451 = vmatpush1.xpose.msra.mxu0 0.0
        %452 = vmatprep.subr.mxu0 0.0
        %453 = vmatpush1.xpose.msra.mxu0 0.0
        %454 = vmatprep.subr.mxu0 0.0
        %455 = vmatpush1.xpose.msra.mxu0 0.0
        %456 = vmatprep.subr.mxu0 0.0
        %457 = vmatpush1.xpose.msra.mxu0 0.0
        %458 = vmatprep.subr.mxu0 0.0
        %459 = vmatpush1.xpose.msra.mxu0 0.0
        %460 = vmatprep.subr.mxu0 0.0
        %461 = vmatpush1.xpose.msra.mxu0 0.0
        %462 = vmatprep.subr.mxu0 0.0
        %463 = vmatpush1.xpose.msra.mxu0 0.0
        %464 = vmatprep.subr.mxu0 0.0
        %465 = vmatpush1.xpose.msra.mxu0 0.0
        %466 = vmatprep.subr.mxu0 0.0
        %467 = vmatpush1.xpose.msra.mxu0 0.0
        %468 = vmatprep.subr.mxu0 0.0
        %469 = vmatpush1.xpose.msra.mxu0 0.0
        %470 = vmatprep.subr.mxu0 0.0
        %471 = vmatpush1.xpose.msra.mxu0 0.0
        %472 = vmatprep.subr.mxu0 0.0
        %473 = vmatpush1.xpose.msra.mxu0 0.0
        %474 = vmatprep.subr.mxu0 0.0
        %475 = vmatpush1.xpose.msra.mxu0 0.0
        %476 = vmatprep.subr.mxu0 0.0
        %477 = vmatpush1.xpose.msra.mxu0 0.0
        %478 = vmatprep.subr.mxu0 0.0
        %479 = vmatpush1.xpose.msra.mxu0 0.0
        %480 = vmatprep.subr.mxu0 0.0
        %481 = vmatpush1.xpose.msra.mxu0 0.0
        %482 = vmatprep.subr.mxu0 0.0
        %483 = vmatpush1.xpose.msra.mxu0 0.0
        %484 = vmatprep.subr.mxu0 0.0
        %485 = vmatpush1.xpose.msra.mxu0 0.0
        %486 = vmatprep.subr.mxu0 0.0
        %487 = vmatpush1.xpose.msra.mxu0 0.0
        %488 = vmatprep.mubr.f32.mxu0 0.0
        %489 = vmatmul.mubr.f32.gmra.mrb[0].mxu0 %v420
        %v490 = vpop.f32.mrb[0].mxu0
        %v491 = vadd.f32 0.0, %v490
        %v492 = vpop.f32.mrb[0].mxu0
        %493 = vdwg.mxu0
        %v494 = vmul.f32 %v491, 0.35355338
        %v495 = vsel %vm419, %v494, -inf
        %496 = vmax.xlane.f32.xlu0 %v495
        %v497 = vpop.xlane.xlu0 %496
        %v498 = vsub.f32 %v494, %v497
        %v499 = vmul.f32 %v498, 1.442695
        %v500 = vpow.pop %v499
        %v501 = vsel %vm419, %v500, 0.0
        %502 = vadd.xlane.f32.xlu0 %v501
        %v503 = vpop.xlane.xlu0 %502
        %v504 = vrcp.pop %v503
        %v505 = vmul.f32 %v500, %v504
        %506 = vrot.lane.b32.xlu0 %v413, 64
        %v507 = vpop.permute.xlu0 %506
        %v510 = vsel %vm419, %v505, 0
        %512 = vmatprep.subr.mxu0 0.0
        %513 = vmatpush1.msra.mxu0 %v507
        %514 = vmatprep.subr.mxu0 0.0
        %515 = vmatpush1.msra.mxu0 0.0
        %516 = vmatprep.subr.mxu0 0.0
        %517 = vmatpush1.msra.mxu0 0.0
        %518 = vmatprep.subr.mxu0 0.0
        %519 = vmatpush1.msra.mxu0 0.0
        %520 = vmatprep.subr.mxu0 0.0
        %521 = vmatpush1.msra.mxu0 0.0
        %522 = vmatprep.subr.mxu0 0.0
        %523 = vmatpush1.msra.mxu0 0.0
        %524 = vmatprep.subr.mxu0 0.0
        %525 = vmatpush1.msra.mxu0 0.0
        %526 = vmatprep.subr.mxu0 0.0
        %527 = vmatpush1.msra.mxu0 0.0
        %528 = vmatprep.subr.mxu0 0.0
        %529 = vmatpush1.msra.mxu0 0.0
        %530 = vmatprep.subr.mxu0 0.0
        %531 = vmatpush1.msra.mxu0 0.0
        %532 = vmatprep.subr.mxu0 0.0
        %533 = vmatpush1.msra.mxu0 0.0
        %534 = vmatprep.subr.mxu0 0.0
        %535 = vmatpush1.msra.mxu0 0.0
        %536 = vmatprep.subr.mxu0 0.0
        %537 = vmatpush1.msra.mxu0 0.0
        %538 = vmatprep.subr.mxu0 0.0
        %539 = vmatpush1.msra.mxu0 0.0
        %540 = vmatprep.subr.mxu0 0.0
        %541 = vmatpush1.msra.mxu0 0.0
        %542 = vmatprep.subr.mxu0 0.0
        %543 = vmatpush1.msra.mxu0 0.0
        %544 = vmatprep.subr.mxu0 0.0
        %545 = vmatpush1.msra.mxu0 0.0
        %546 = vmatprep.subr.mxu0 0.0
        %547 = vmatpush1.msra.mxu0 0.0
        %548 = vmatprep.subr.mxu0 0.0
        %549 = vmatpush1.msra.mxu0 0.0
        %550 = vmatprep.subr.mxu0 0.0
        %551 = vmatpush1.msra.mxu0 0.0
        %552 = vmatprep.subr.mxu0 0.0
        %553 = vmatpush1.msra.mxu0 0.0
        %554 = vmatprep.subr.mxu0 0.0
        %555 = vmatpush1.msra.mxu0 0.0
        %556 = vmatprep.subr.mxu0 0.0
        %557 = vmatpush1.msra.mxu0 0.0
        %558 = vmatprep.subr.mxu0 0.0
        %559 = vmatpush1.msra.mxu0 0.0
        %560 = vmatprep.subr.mxu0 0.0
        %561 = vmatpush1.msra.mxu0 0.0
        %562 = vmatprep.subr.mxu0 0.0
        %563 = vmatpush1.msra.mxu0 0.0
        %564 = vmatprep.subr.mxu0 0.0
        %565 = vmatpush1.msra.mxu0 0.0
        %566 = vmatprep.subr.mxu0 0.0
        %567 = vmatpush1.msra.mxu0 0.0
        %568 = vmatprep.subr.mxu0 0.0
        %569 = vmatpush1.msra.mxu0 0.0
        %570 = vmatprep.subr.mxu0 0.0
        %571 = vmatpush1.msra.mxu0 0.0
        %572 = vmatprep.subr.mxu0 0.0
        %573 = vmatpush1.msra.mxu0 0.0
        %574 = vmatprep.subr.mxu0 0.0
        %575 = vmatpush1.msra.mxu0 0.0
        %576 = vmatprep.mubr.f32.mxu0 0.0
        %577 = vmatmul.mubr.f32.gmra.mrb[0].mxu0 %v510
        %v578 = vpop.f32.mrb[0].mxu0
        %v579 = vadd.f32 0.0, %v578
        %v580 = vpop.f32.mrb[0].mxu0
        %581 = vdwg.mxu0
        %v582 = vld [vmem:[%s5] sm:$0xff]
        %583 = vrot.lane.b32.xlu0 %v413, 120
        %v584 = vpop.permute.xlu0 %583
        %585 = vrot.lane.b32.xlu0 %v413, 88
        %v586 = vpop.permute.xlu0 %585
        %v587 = vsel %vm419, %v584, 0
        %v589 = vsel %vm419, %v586, 0
        %591 = vmatprep.subr.mxu0 0.0
        %592 = vmatpush1.xpose.msra.mxu0 %v589
        %593 = vmatprep.subr.mxu0 0.0
        %594 = vmatpush1.xpose.msra.mxu0 0.0
        %595 = vmatprep.subr.mxu0 0.0
        %596 = vmatpush1.xpose.msra.mxu0 0.0
        %597 = vmatprep.subr.mxu0 0.0
        %598 = vmatpush1.xpose.msra.mxu0 0.0
        %599 = vmatprep.subr.mxu0 0.0
        %600 = vmatpush1.xpose.msra.mxu0 0.0
        %601 = vmatprep.subr.mxu0 0.0
        %602 = vmatpush1.xpose.msra.mxu0 0.0
        %603 = vmatprep.subr.mxu0 0.0
        %604 = vmatpush1.xpose.msra.mxu0 0.0
        %605 = vmatprep.subr.mxu0 0.0
        %606 = vmatpush1.xpose.msra.mxu0 0.0
        %607 = vmatprep.subr.mxu0 0.0
        %608 = vmatpush1.xpose.msra.mxu0 0.0
        %609 = vmatprep.subr.mxu0 0.0
        %610 = vmatpush1.xpose.msra.mxu0 0.0
        %611 = vmatprep.subr.mxu0 0.0
        %612 = vmatpush1.xpose.msra.mxu0 0.0
        %613 = vmatprep.subr.mxu0 0.0
        %614 = vmatpush1.xpose.msra.mxu0 0.0
        %615 = vmatprep.subr.mxu0 0.0
        %616 = vmatpush1.xpose.msra.mxu0 0.0
        %617 = vmatprep.subr.mxu0 0.0
        %618 = vmatpush1.xpose.msra.mxu0 0.0
        %619 = vmatprep.subr.mxu0 0.0
        %620 = vmatpush1.xpose.msra.mxu0 0.0
        %621 = vmatprep.subr.mxu0 0.0
        %622 = vmatpush1.xpose.msra.mxu0 0.0
        %623 = vmatprep.subr.mxu0 0.0
        %624 = vmatpush1.xpose.msra.mxu0 0.0
        %625 = vmatprep.subr.mxu0 0.0
        %626 = vmatpush1.xpose.msra.mxu0 0.0
        %627 = vmatprep.subr.mxu0 0.0
        %628 = vmatpush1.xpose.msra.mxu0 0.0
        %629 = vmatprep.subr.mxu0 0.0
        %630 = vmatpush1.xpose.msra.mxu0 0.0
        %631 = vmatprep.subr.mxu0 0.0
        %632 = vmatpush1.xpose.msra.mxu0 0.0
        %633 = vmatprep.subr.mxu0 0.0
        %634 = vmatpush1.xpose.msra.mxu0 0.0
        %635 = vmatprep.subr.mxu0 0.0
        %636 = vmatpush1.xpose.msra.mxu0 0.0
        %637 = vmatprep.subr.mxu0 0.0
        %638 = vmatpush1.xpose.msra.mxu0 0.0
        %639 = vmatprep.subr.mxu0 0.0
        %640 = vmatpush1.xpose.msra.mxu0 0.0
        %641 = vmatprep.subr.mxu0 0.0
        %642 = vmatpush1.xpose.msra.mxu0 0.0
        %643 = vmatprep.subr.mxu0 0.0
        %644 = vmatpush1.xpose.msra.mxu0 0.0
        %645 = vmatprep.subr.mxu0 0.0
        %646 = vmatpush1.xpose.msra.mxu0 0.0
        %647 = vmatprep.subr.mxu0 0.0
        %648 = vmatpush1.xpose.msra.mxu0 0.0
        %649 = vmatprep.subr.mxu0 0.0
        %650 = vmatpush1.xpose.msra.mxu0 0.0
        %651 = vmatprep.subr.mxu0 0.0
        %652 = vmatpush1.xpose.msra.mxu0 0.0
        %653 = vmatprep.subr.mxu0 0.0
        %654 = vmatpush1.xpose.msra.mxu0 0.0
        %655 = vmatprep.mubr.f32.mxu0 0.0
        %656 = vmatmul.mubr.f32.gmra.mrb[0].mxu0 %v587
        %v657 = vpop.f32.mrb[0].mxu0
        %v658 = vadd.f32 0.0, %v657
        %v659 = vpop.f32.mrb[0].mxu0
        %660 = vdwg.mxu0
        %v661 = vmul.f32 %v658, 0.35355338
        %v662 = vsel %vm419, %v661, -inf
        %663 = vmax.xlane.f32.xlu0 %v662
        %v664 = vpop.xlane.xlu0 %663
        %v665 = vsub.f32 %v661, %v664
        %v666 = vmul.f32 %v665, 1.442695
        %v667 = vpow.pop %v666
        %v668 = vsel %vm419, %v667, 0.0
        %669 = vadd.xlane.f32.xlu0 %v668
        %v670 = vpop.xlane.xlu0 %669
        %v671 = vrcp.pop %v670
        %v672 = vmul.f32 %v667, %v671
        %673 = vrot.lane.b32.xlu0 %v413, 56
        %v674 = vpop.permute.xlu0 %673
        %v677 = vsel %vm419, %v672, 0
        %679 = vmatprep.subr.mxu0 0.0
        %680 = vmatpush1.msra.mxu0 %v674
        %681 = vmatprep.subr.mxu0 0.0
        %682 = vmatpush1.msra.mxu0 0.0
        %683 = vmatprep.subr.mxu0 0.0
        %684 = vmatpush1.msra.mxu0 0.0
        %685 = vmatprep.subr.mxu0 0.0
        %686 = vmatpush1.msra.mxu0 0.0
        %687 = vmatprep.subr.mxu0 0.0
        %688 = vmatpush1.msra.mxu0 0.0
        %689 = vmatprep.subr.mxu0 0.0
        %690 = vmatpush1.msra.mxu0 0.0
        %691 = vmatprep.subr.mxu0 0.0
        %692 = vmatpush1.msra.mxu0 0.0
        %693 = vmatprep.subr.mxu0 0.0
        %694 = vmatpush1.msra.mxu0 0.0
        %695 = vmatprep.subr.mxu0 0.0
        %696 = vmatpush1.msra.mxu0 0.0
        %697 = vmatprep.subr.mxu0 0.0
        %698 = vmatpush1.msra.mxu0 0.0
        %699 = vmatprep.subr.mxu0 0.0
        %700 = vmatpush1.msra.mxu0 0.0
        %701 = vmatprep.subr.mxu0 0.0
        %702 = vmatpush1.msra.mxu0 0.0
        %703 = vmatprep.subr.mxu0 0.0
        %704 = vmatpush1.msra.mxu0 0.0
        %705 = vmatprep.subr.mxu0 0.0
        %706 = vmatpush1.msra.mxu0 0.0
        %707 = vmatprep.subr.mxu0 0.0
        %708 = vmatpush1.msra.mxu0 0.0
        %709 = vmatprep.subr.mxu0 0.0
        %710 = vmatpush1.msra.mxu0 0.0
        %711 = vmatprep.subr.mxu0 0.0
        %712 = vmatpush1.msra.mxu0 0.0
        %713 = vmatprep.subr.mxu0 0.0
        %714 = vmatpush1.msra.mxu0 0.0
        %715 = vmatprep.subr.mxu0 0.0
        %716 = vmatpush1.msra.mxu0 0.0
        %717 = vmatprep.subr.mxu0 0.0
        %718 = vmatpush1.msra.mxu0 0.0
        %719 = vmatprep.subr.mxu0 0.0
        %720 = vmatpush1.msra.mxu0 0.0
        %721 = vmatprep.subr.mxu0 0.0
        %722 = vmatpush1.msra.mxu0 0.0
        %723 = vmatprep.subr.mxu0 0.0
        %724 = vmatpush1.msra.mxu0 0.0
        %725 = vmatprep.subr.mxu0 0.0
        %726 = vmatpush1.msra.mxu0 0.0
        %727 = vmatprep.subr.mxu0 0.0
        %728 = vmatpush1.msra.mxu0 0.0
        %729 = vmatprep.subr.mxu0 0.0
        %730 = vmatpush1.msra.mxu0 0.0
        %731 = vmatprep.subr.mxu0 0.0
        %732 = vmatpush1.msra.mxu0 0.0
        %733 = vmatprep.subr.mxu0 0.0
        %734 = vmatpush1.msra.mxu0 0.0
        %735 = vmatprep.subr.mxu0 0.0
        %736 = vmatpush1.msra.mxu0 0.0
        %737 = vmatprep.subr.mxu0 0.0
        %738 = vmatpush1.msra.mxu0 0.0
        %739 = vmatprep.subr.mxu0 0.0
        %740 = vmatpush1.msra.mxu0 0.0
        %741 = vmatprep.subr.mxu0 0.0
        %742 = vmatpush1.msra.mxu0 0.0
        %743 = vmatprep.mubr.f32.mxu0 0.0
        %744 = vmatmul.mubr.f32.gmra.mrb[0].mxu0 %v677
        %v745 = vpop.f32.mrb[0].mxu0
        %v746 = vadd.f32 0.0, %v745
        %v747 = vpop.f32.mrb[0].mxu0
        %748 = vdwg.mxu0
        %v749 = vld [vmem:[%s5 + $0x8] sm:$0xff]
        %v751 = vsel %vm419, %v746, 0
        %753 = vmatprep.subr.mxu0 0.0
        %754 = vmatpush1.msra.mxu0 %v749
        %755 = vmatprep.subr.mxu0 0.0
        %756 = vmatpush1.msra.mxu0 0.0
        %757 = vmatprep.subr.mxu0 0.0
        %758 = vmatpush1.msra.mxu0 0.0
        %759 = vmatprep.subr.mxu0 0.0
        %760 = vmatpush1.msra.mxu0 0.0
        %761 = vmatprep.subr.mxu0 0.0
        %762 = vmatpush1.msra.mxu0 0.0
        %763 = vmatprep.subr.mxu0 0.0
        %764 = vmatpush1.msra.mxu0 0.0
        %765 = vmatprep.subr.mxu0 0.0
        %766 = vmatpush1.msra.mxu0 0.0
        %767 = vmatprep.subr.mxu0 0.0
        %768 = vmatpush1.msra.mxu0 0.0
        %769 = vmatprep.subr.mxu0 0.0
        %770 = vmatpush1.msra.mxu0 0.0
        %771 = vmatprep.subr.mxu0 0.0
        %772 = vmatpush1.msra.mxu0 0.0
        %773 = vmatprep.subr.mxu0 0.0
        %774 = vmatpush1.msra.mxu0 0.0
        %775 = vmatprep.subr.mxu0 0.0
        %776 = vmatpush1.msra.mxu0 0.0
        %777 = vmatprep.subr.mxu0 0.0
        %778 = vmatpush1.msra.mxu0 0.0
        %779 = vmatprep.subr.mxu0 0.0
        %780 = vmatpush1.msra.mxu0 0.0
        %781 = vmatprep.subr.mxu0 0.0
        %782 = vmatpush1.msra.mxu0 0.0
        %783 = vmatprep.subr.mxu0 0.0
        %784 = vmatpush1.msra.mxu0 0.0
        %785 = vmatprep.subr.mxu0 0.0
        %786 = vmatpush1.msra.mxu0 0.0
        %787 = vmatprep.subr.mxu0 0.0
        %788 = vmatpush1.msra.mxu0 0.0
        %789 = vmatprep.subr.mxu0 0.0
        %790 = vmatpush1.msra.mxu0 0.0
        %791 = vmatprep.subr.mxu0 0.0
        %792 = vmatpush1.msra.mxu0 0.0
        %793 = vmatprep.subr.mxu0 0.0
        %794 = vmatpush1.msra.mxu0 0.0
        %795 = vmatprep.subr.mxu0 0.0
        %796 = vmatpush1.msra.mxu0 0.0
        %797 = vmatprep.subr.mxu0 0.0
        %798 = vmatpush1.msra.mxu0 0.0
        %799 = vmatprep.subr.mxu0 0.0
        %800 = vmatpush1.msra.mxu0 0.0
        %801 = vmatprep.subr.mxu0 0.0
        %802 = vmatpush1.msra.mxu0 0.0
        %803 = vmatprep.subr.mxu0 0.0
        %804 = vmatpush1.msra.mxu0 0.0
        %805 = vmatprep.subr.mxu0 0.0
        %806 = vmatpush1.msra.mxu0 0.0
        %807 = vmatprep.subr.mxu0 0.0
        %808 = vmatpush1.msra.mxu0 0.0
        %809 = vmatprep.subr.mxu0 0.0
        %810 = vmatpush1.msra.mxu0 0.0
        %811 = vmatprep.subr.mxu0 0.0
        %812 = vmatpush1.msra.mxu0 0.0
        %813 = vmatprep.subr.mxu0 0.0
        %814 = vmatpush1.msra.mxu0 0.0
        %815 = vmatprep.subr.mxu0 0.0
        %816 = vmatpush1.msra.mxu0 0.0
        %817 = vmatprep.mubr.f32.mxu0 0.0
        %818 = vmatmul.mubr.f32.gmra.mrb[0].mxu0 %v751
        %v819 = vpop.f32.mrb[0].mxu0
        %v820 = vadd.f32 0.0, %v819
        %v821 = vpop.f32.mrb[0].mxu0
        %822 = vdwg.mxu0
        %v824 = vsel %vm419, %v579, 0
        %826 = vmatprep.subr.mxu0 0.0
        %827 = vmatpush1.msra.mxu0 %v582
        %828 = vmatprep.subr.mxu0 0.0
        %829 = vmatpush1.msra.mxu0 0.0
        %830 = vmatprep.subr.mxu0 0.0
        %831 = vmatpush1.msra.mxu0 0.0
        %832 = vmatprep.subr.mxu0 0.0
        %833 = vmatpush1.msra.mxu0 0.0
        %834 = vmatprep.subr.mxu0 0.0
        %835 = vmatpush1.msra.mxu0 0.0
        %836 = vmatprep.subr.mxu0 0.0
        %837 = vmatpush1.msra.mxu0 0.0
        %838 = vmatprep.subr.mxu0 0.0
        %839 = vmatpush1.msra.mxu0 0.0
        %840 = vmatprep.subr.mxu0 0.0
        %841 = vmatpush1.msra.mxu0 0.0
        %842 = vmatprep.subr.mxu0 0.0
        %843 = vmatpush1.msra.mxu0 0.0
        %844 = vmatprep.subr.mxu0 0.0
        %845 = vmatpush1.msra.mxu0 0.0
        %846 = vmatprep.subr.mxu0 0.0
        %847 = vmatpush1.msra.mxu0 0.0
        %848 = vmatprep.subr.mxu0 0.0
        %849 = vmatpush1.msra.mxu0 0.0
        %850 = vmatprep.subr.mxu0 0.0
        %851 = vmatpush1.msra.mxu0 0.0
        %852 = vmatprep.subr.mxu0 0.0
        %853 = vmatpush1.msra.mxu0 0.0
        %854 = vmatprep.subr.mxu0 0.0
        %855 = vmatpush1.msra.mxu0 0.0
        %856 = vmatprep.subr.mxu0 0.0
        %857 = vmatpush1.msra.mxu0 0.0
        %858 = vmatprep.subr.mxu0 0.0
        %859 = vmatpush1.msra.mxu0 0.0
        %860 = vmatprep.subr.mxu0 0.0
        %861 = vmatpush1.msra.mxu0 0.0
        %862 = vmatprep.subr.mxu0 0.0
        %863 = vmatpush1.msra.mxu0 0.0
        %864 = vmatprep.subr.mxu0 0.0
        %865 = vmatpush1.msra.mxu0 0.0
        %866 = vmatprep.subr.mxu0 0.0
        %867 = vmatpush1.msra.mxu0 0.0
        %868 = vmatprep.subr.mxu0 0.0
        %869 = vmatpush1.msra.mxu0 0.0
        %870 = vmatprep.subr.mxu0 0.0
        %871 = vmatpush1.msra.mxu0 0.0
        %872 = vmatprep.subr.mxu0 0.0
        %873 = vmatpush1.msra.mxu0 0.0
        %874 = vmatprep.subr.mxu0 0.0
        %875 = vmatpush1.msra.mxu0 0.0
        %876 = vmatprep.subr.mxu0 0.0
        %877 = vmatpush1.msra.mxu0 0.0
        %878 = vmatprep.subr.mxu0 0.0
        %879 = vmatpush1.msra.mxu0 0.0
        %880 = vmatprep.subr.mxu0 0.0
        %881 = vmatpush1.msra.mxu0 0.0
        %882 = vmatprep.subr.mxu0 0.0
        %883 = vmatpush1.msra.mxu0 0.0
        %884 = vmatprep.subr.mxu0 0.0
        %885 = vmatpush1.msra.mxu0 0.0
        %886 = vmatprep.subr.mxu0 0.0
        %887 = vmatpush1.msra.mxu0 0.0
        %888 = vmatprep.subr.mxu0 0.0
        %889 = vmatpush1.msra.mxu0 0.0
        %890 = vmatprep.mubr.f32.mxu0 0.0
        %891 = vmatmul.mubr.f32.gmra.mrb[0].mxu0 %v824
        %v892 = vpop.f32.mrb[0].mxu0
        %v893 = vadd.f32 %v820, %v892
        %v894 = vpop.f32.mrb[0].mxu0
        %895 = vdwg.mxu0
        %896 = vrot.lane.b32.xlu0 %v413, 112
        %v897 = vpop.permute.xlu0 %896
        %898 = vrot.lane.b32.xlu0 %v413, 80
        %v899 = vpop.permute.xlu0 %898
        %v900 = vsel %vm419, %v897, 0
        %v902 = vsel %vm419, %v899, 0
        %904 = vmatprep.subr.mxu0 0.0
        %905 = vmatpush1.xpose.msra.mxu0 %v902
        %906 = vmatprep.subr.mxu0 0.0
        %907 = vmatpush1.xpose.msra.mxu0 0.0
        %908 = vmatprep.subr.mxu0 0.0
        %909 = vmatpush1.xpose.msra.mxu0 0.0
        %910 = vmatprep.subr.mxu0 0.0
        %911 = vmatpush1.xpose.msra.mxu0 0.0
        %912 = vmatprep.subr.mxu0 0.0
        %913 = vmatpush1.xpose.msra.mxu0 0.0
        %914 = vmatprep.subr.mxu0 0.0
        %915 = vmatpush1.xpose.msra.mxu0 0.0
        %916 = vmatprep.subr.mxu0 0.0
        %917 = vmatpush1.xpose.msra.mxu0 0.0
        %918 = vmatprep.subr.mxu0 0.0
        %919 = vmatpush1.xpose.msra.mxu0 0.0
        %920 = vmatprep.subr.mxu0 0.0
        %921 = vmatpush1.xpose.msra.mxu0 0.0
        %922 = vmatprep.subr.mxu0 0.0
        %923 = vmatpush1.xpose.msra.mxu0 0.0
        %924 = vmatprep.subr.mxu0 0.0
        %925 = vmatpush1.xpose.msra.mxu0 0.0
        %926 = vmatprep.subr.mxu0 0.0
        %927 = vmatpush1.xpose.msra.mxu0 0.0
        %928 = vmatprep.subr.mxu0 0.0
        %929 = vmatpush1.xpose.msra.mxu0 0.0
        %930 = vmatprep.subr.mxu0 0.0
        %931 = vmatpush1.xpose.msra.mxu0 0.0
        %932 = vmatprep.subr.mxu0 0.0
        %933 = vmatpush1.xpose.msra.mxu0 0.0
        %934 = vmatprep.subr.mxu0 0.0
        %935 = vmatpush1.xpose.msra.mxu0 0.0
        %936 = vmatprep.subr.mxu0 0.0
        %937 = vmatpush1.xpose.msra.mxu0 0.0
        %938 = vmatprep.subr.mxu0 0.0
        %939 = vmatpush1.xpose.msra.mxu0 0.0
        %940 = vmatprep.subr.mxu0 0.0
        %941 = vmatpush1.xpose.msra.mxu0 0.0
        %942 = vmatprep.subr.mxu0 0.0
        %943 = vmatpush1.xpose.msra.mxu0 0.0
        %944 = vmatprep.subr.mxu0 0.0
        %945 = vmatpush1.xpose.msra.mxu0 0.0
        %946 = vmatprep.subr.mxu0 0.0
        %947 = vmatpush1.xpose.msra.mxu0 0.0
        %948 = vmatprep.subr.mxu0 0.0
        %949 = vmatpush1.xpose.msra.mxu0 0.0
        %950 = vmatprep.subr.mxu0 0.0
        %951 = vmatpush1.xpose.msra.mxu0 0.0
        %952 = vmatprep.subr.mxu0 0.0
        %953 = vmatpush1.xpose.msra.mxu0 0.0
        %954 = vmatprep.subr.mxu0 0.0
        %955 = vmatpush1.xpose.msra.mxu0 0.0
        %956 = vmatprep.subr.mxu0 0.0
        %957 = vmatpush1.xpose.msra.mxu0 0.0
        %958 = vmatprep.subr.mxu0 0.0
        %959 = vmatpush1.xpose.msra.mxu0 0.0
        %960 = vmatprep.subr.mxu0 0.0
        %961 = vmatpush1.xpose.msra.mxu0 0.0
        %962 = vmatprep.subr.mxu0 0.0
        %963 = vmatpush1.xpose.msra.mxu0 0.0
        %964 = vmatprep.subr.mxu0 0.0
        %965 = vmatpush1.xpose.msra.mxu0 0.0
        %966 = vmatprep.subr.mxu0 0.0
        %967 = vmatpush1.xpose.msra.mxu0 0.0
        %968 = vmatprep.mubr.f32.mxu0 0.0
        %969 = vmatmul.mubr.f32.gmra.mrb[0].mxu0 %v900
        %v970 = vpop.f32.mrb[0].mxu0
        %v971 = vadd.f32 0.0, %v970
        %v972 = vpop.f32.mrb[0].mxu0
        %973 = vdwg.mxu0
        %v974 = vmul.f32 %v971, 0.35355338
        %v975 = vsel %vm419, %v974, -inf
        %976 = vmax.xlane.f32.xlu0 %v975
        %v977 = vpop.xlane.xlu0 %976
        %v978 = vsub.f32 %v974, %v977
        %v979 = vmul.f32 %v978, 1.442695
        %v980 = vpow.pop %v979
        %v981 = vsel %vm419, %v980, 0.0
        %982 = vadd.xlane.f32.xlu0 %v981
        %v983 = vpop.xlane.xlu0 %982
        %v984 = vrcp.pop %v983
        %v985 = vmul.f32 %v980, %v984
        %986 = vrot.lane.b32.xlu0 %v413, 48
        %v987 = vpop.permute.xlu0 %986
        %v990 = vsel %vm419, %v985, 0
        %992 = vmatprep.subr.mxu0 0.0
        %993 = vmatpush1.msra.mxu0 %v987
        %994 = vmatprep.subr.mxu0 0.0
        %995 = vmatpush1.msra.mxu0 0.0
        %996 = vmatprep.subr.mxu0 0.0
        %997 = vmatpush1.msra.mxu0 0.0
        %998 = vmatprep.subr.mxu0 0.0
        %999 = vmatpush1.msra.mxu0 0.0
        %1000 = vmatprep.subr.mxu0 0.0
        %1001 = vmatpush1.msra.mxu0 0.0
        %1002 = vmatprep.subr.mxu0 0.0
        %1003 = vmatpush1.msra.mxu0 0.0
        %1004 = vmatprep.subr.mxu0 0.0
        %1005 = vmatpush1.msra.mxu0 0.0
        %1006 = vmatprep.subr.mxu0 0.0
        %1007 = vmatpush1.msra.mxu0 0.0
        %1008 = vmatprep.subr.mxu0 0.0
        %1009 = vmatpush1.msra.mxu0 0.0
        %1010 = vmatprep.subr.mxu0 0.0
        %1011 = vmatpush1.msra.mxu0 0.0
        %1012 = vmatprep.subr.mxu0 0.0
        %1013 = vmatpush1.msra.mxu0 0.0
        %1014 = vmatprep.subr.mxu0 0.0
        %1015 = vmatpush1.msra.mxu0 0.0
        %1016 = vmatprep.subr.mxu0 0.0
        %1017 = vmatpush1.msra.mxu0 0.0
        %1018 = vmatprep.subr.mxu0 0.0
        %1019 = vmatpush1.msra.mxu0 0.0
        %1020 = vmatprep.subr.mxu0 0.0
        %1021 = vmatpush1.msra.mxu0 0.0
        %1022 = vmatprep.subr.mxu0 0.0
        %1023 = vmatpush1.msra.mxu0 0.0
        %1024 = vmatprep.subr.mxu0 0.0
        %1025 = vmatpush1.msra.mxu0 0.0
        %1026 = vmatprep.subr.mxu0 0.0
        %1027 = vmatpush1.msra.mxu0 0.0
        %1028 = vmatprep.subr.mxu0 0.0
        %1029 = vmatpush1.msra.mxu0 0.0
        %1030 = vmatprep.subr.mxu0 0.0
        %1031 = vmatpush1.msra.mxu0 0.0
        %1032 = vmatprep.subr.mxu0 0.0
        %1033 = vmatpush1.msra.mxu0 0.0
        %1034 = vmatprep.subr.mxu0 0.0
        %1035 = vmatpush1.msra.mxu0 0.0
        %1036 = vmatprep.subr.mxu0 0.0
        %1037 = vmatpush1.msra.mxu0 0.0
        %1038 = vmatprep.subr.mxu0 0.0
        %1039 = vmatpush1.msra.mxu0 0.0
        %1040 = vmatprep.subr.mxu0 0.0
        %1041 = vmatpush1.msra.mxu0 0.0
        %1042 = vmatprep.subr.mxu0 0.0
        %1043 = vmatpush1.msra.mxu0 0.0
        %1044 = vmatprep.subr.mxu0 0.0
        %1045 = vmatpush1.msra.mxu0 0.0
        %1046 = vmatprep.subr.mxu0 0.0
        %1047 = vmatpush1.msra.mxu0 0.0
        %1048 = vmatprep.subr.mxu0 0.0
        %1049 = vmatpush1.msra.mxu0 0.0
        %1050 = vmatprep.subr.mxu0 0.0
        %1051 = vmatpush1.msra.mxu0 0.0
        %1052 = vmatprep.subr.mxu0 0.0
        %1053 = vmatpush1.msra.mxu0 0.0
        %1054 = vmatprep.subr.mxu0 0.0
        %1055 = vmatpush1.msra.mxu0 0.0
        %1056 = vmatprep.mubr.f32.mxu0 0.0
        %1057 = vmatmul.mubr.f32.gmra.mrb[0].mxu0 %v990
        %v1058 = vpop.f32.mrb[0].mxu0
        %v1059 = vadd.f32 0.0, %v1058
        %v1060 = vpop.f32.mrb[0].mxu0
        %1061 = vdwg.mxu0
        %v1062 = vld [vmem:[%s5 + $0x10] sm:$0xff]
        %v1064 = vsel %vm419, %v1059, 0
        %1066 = vmatprep.subr.mxu0 0.0
        %1067 = vmatpush1.msra.mxu0 %v1062
        %1068 = vmatprep.subr.mxu0 0.0
        %1069 = vmatpush1.msra.mxu0 0.0
        %1070 = vmatprep.subr.mxu0 0.0
        %1071 = vmatpush1.msra.mxu0 0.0
        %1072 = vmatprep.subr.mxu0 0.0
        %1073 = vmatpush1.msra.mxu0 0.0
        %1074 = vmatprep.subr.mxu0 0.0
        %1075 = vmatpush1.msra.mxu0 0.0
        %1076 = vmatprep.subr.mxu0 0.0
        %1077 = vmatpush1.msra.mxu0 0.0
        %1078 = vmatprep.subr.mxu0 0.0
        %1079 = vmatpush1.msra.mxu0 0.0
        %1080 = vmatprep.subr.mxu0 0.0
        %1081 = vmatpush1.msra.mxu0 0.0
        %1082 = vmatprep.subr.mxu0 0.0
        %1083 = vmatpush1.msra.mxu0 0.0
        %1084 = vmatprep.subr.mxu0 0.0
        %1085 = vmatpush1.msra.mxu0 0.0
        %1086 = vmatprep.subr.mxu0 0.0
        %1087 = vmatpush1.msra.mxu0 0.0
        %1088 = vmatprep.subr.mxu0 0.0
        %1089 = vmatpush1.msra.mxu0 0.0
        %1090 = vmatprep.subr.mxu0 0.0
        %1091 = vmatpush1.msra.mxu0 0.0
        %1092 = vmatprep.subr.mxu0 0.0
        %1093 = vmatpush1.msra.mxu0 0.0
        %1094 = vmatprep.subr.mxu0 0.0
        %1095 = vmatpush1.msra.mxu0 0.0
        %1096 = vmatprep.subr.mxu0 0.0
        %1097 = vmatpush1.msra.mxu0 0.0
        %1098 = vmatprep.subr.mxu0 0.0
        %1099 = vmatpush1.msra.mxu0 0.0
        %1100 = vmatprep.subr.mxu0 0.0
        %1101 = vmatpush1.msra.mxu0 0.0
        %1102 = vmatprep.subr.mxu0 0.0
        %1103 = vmatpush1.msra.mxu0 0.0
        %1104 = vmatprep.subr.mxu0 0.0
        %1105 = vmatpush1.msra.mxu0 0.0
        %1106 = vmatprep.subr.mxu0 0.0
        %1107 = vmatpush1.msra.mxu0 0.0
        %1108 = vmatprep.subr.mxu0 0.0
        %1109 = vmatpush1.msra.mxu0 0.0
        %1110 = vmatprep.subr.mxu0 0.0
        %1111 = vmatpush1.msra.mxu0 0.0
        %1112 = vmatprep.subr.mxu0 0.0
        %1113 = vmatpush1.msra.mxu0 0.0
        %1114 = vmatprep.subr.mxu0 0.0
        %1115 = vmatpush1.msra.mxu0 0.0
        %1116 = vmatprep.subr.mxu0 0.0
        %1117 = vmatpush1.msra.mxu0 0.0
        %1118 = vmatprep.subr.mxu0 0.0
        %1119 = vmatpush1.msra.mxu0 0.0
        %1120 = vmatprep.subr.mxu0 0.0
        %1121 = vmatpush1.msra.mxu0 0.0
        %1122 = vmatprep.subr.mxu0 0.0
        %1123 = vmatpush1.msra.mxu0 0.0
        %1124 = vmatprep.subr.mxu0 0.0
        %1125 = vmatpush1.msra.mxu0 0.0
        %1126 = vmatprep.subr.mxu0 0.0
        %1127 = vmatpush1.msra.mxu0 0.0
        %1128 = vmatprep.subr.mxu0 0.0
        %1129 = vmatpush1.msra.mxu0 0.0
        %1130 = vmatprep.mubr.f32.mxu0 0.0
        %1131 = vmatmul.mubr.f32.gmra.mrb[0].mxu0 %v1064
        %v1132 = vpop.f32.mrb[0].mxu0
        %v1133 = vadd.f32 0.0, %v1132
        %v1134 = vpop.f32.mrb[0].mxu0
        %1135 = vdwg.mxu0
        %v1136 = vadd.f32 %v893, %v1133
        %1137 = vrot.lane.b32.xlu0 %v413, 104
        %v1138 = vpop.permute.xlu0 %1137
        %1139 = vrot.lane.b32.xlu0 %v413, 72
        %v1140 = vpop.permute.xlu0 %1139
        %v1141 = vsel %vm419, %v1138, 0
        %v1143 = vsel %vm419, %v1140, 0
        %1145 = vmatprep.subr.mxu0 0.0
        %1146 = vmatpush1.xpose.msra.mxu0 %v1143
        %1147 = vmatprep.subr.mxu0 0.0
        %1148 = vmatpush1.xpose.msra.mxu0 0.0
        %1149 = vmatprep.subr.mxu0 0.0
        %1150 = vmatpush1.xpose.msra.mxu0 0.0
        %1151 = vmatprep.subr.mxu0 0.0
        %1152 = vmatpush1.xpose.msra.mxu0 0.0
        %1153 = vmatprep.subr.mxu0 0.0
        %1154 = vmatpush1.xpose.msra.mxu0 0.0
        %1155 = vmatprep.subr.mxu0 0.0
        %1156 = vmatpush1.xpose.msra.mxu0 0.0
        %1157 = vmatprep.subr.mxu0 0.0
        %1158 = vmatpush1.xpose.msra.mxu0 0.0
        %1159 = vmatprep.subr.mxu0 0.0
        %1160 = vmatpush1.xpose.msra.mxu0 0.0
        %1161 = vmatprep.subr.mxu0 0.0
        %1162 = vmatpush1.xpose.msra.mxu0 0.0
        %1163 = vmatprep.subr.mxu0 0.0
        %1164 = vmatpush1.xpose.msra.mxu0 0.0
        %1165 = vmatprep.subr.mxu0 0.0
        %1166 = vmatpush1.xpose.msra.mxu0 0.0
        %1167 = vmatprep.subr.mxu0 0.0
        %1168 = vmatpush1.xpose.msra.mxu0 0.0
        %1169 = vmatprep.subr.mxu0 0.0
        %1170 = vmatpush1.xpose.msra.mxu0 0.0
        %1171 = vmatprep.subr.mxu0 0.0
        %1172 = vmatpush1.xpose.msra.mxu0 0.0
        %1173 = vmatprep.subr.mxu0 0.0
        %1174 = vmatpush1.xpose.msra.mxu0 0.0
        %1175 = vmatprep.subr.mxu0 0.0
        %1176 = vmatpush1.xpose.msra.mxu0 0.0
        %1177 = vmatprep.subr.mxu0 0.0
        %1178 = vmatpush1.xpose.msra.mxu0 0.0
        %1179 = vmatprep.subr.mxu0 0.0
        %1180 = vmatpush1.xpose.msra.mxu0 0.0
        %1181 = vmatprep.subr.mxu0 0.0
        %1182 = vmatpush1.xpose.msra.mxu0 0.0
        %1183 = vmatprep.subr.mxu0 0.0
        %1184 = vmatpush1.xpose.msra.mxu0 0.0
        %1185 = vmatprep.subr.mxu0 0.0
        %1186 = vmatpush1.xpose.msra.mxu0 0.0
        %1187 = vmatprep.subr.mxu0 0.0
        %1188 = vmatpush1.xpose.msra.mxu0 0.0
        %1189 = vmatprep.subr.mxu0 0.0
        %1190 = vmatpush1.xpose.msra.mxu0 0.0
        %1191 = vmatprep.subr.mxu0 0.0
        %1192 = vmatpush1.xpose.msra.mxu0 0.0
        %1193 = vmatprep.subr.mxu0 0.0
        %1194 = vmatpush1.xpose.msra.mxu0 0.0
        %1195 = vmatprep.subr.mxu0 0.0
        %1196 = vmatpush1.xpose.msra.mxu0 0.0
        %1197 = vmatprep.subr.mxu0 0.0
        %1198 = vmatpush1.xpose.msra.mxu0 0.0
        %1199 = vmatprep.subr.mxu0 0.0
        %1200 = vmatpush1.xpose.msra.mxu0 0.0
        %1201 = vmatprep.subr.mxu0 0.0
        %1202 = vmatpush1.xpose.msra.mxu0 0.0
        %1203 = vmatprep.subr.mxu0 0.0
        %1204 = vmatpush1.xpose.msra.mxu0 0.0
        %1205 = vmatprep.subr.mxu0 0.0
        %1206 = vmatpush1.xpose.msra.mxu0 0.0
        %1207 = vmatprep.subr.mxu0 0.0
        %1208 = vmatpush1.xpose.msra.mxu0 0.0
        %1209 = vmatprep.mubr.f32.mxu0 0.0
        %1210 = vmatmul.mubr.f32.gmra.mrb[0].mxu0 %v1141
        %v1211 = vpop.f32.mrb[0].mxu0
        %v1212 = vadd.f32 0.0, %v1211
        %v1213 = vpop.f32.mrb[0].mxu0
        %1214 = vdwg.mxu0
        %v1215 = vmul.f32 %v1212, 0.35355338
        %v1216 = vsel %vm419, %v1215, -inf
        %1217 = vmax.xlane.f32.xlu0 %v1216
        %v1218 = vpop.xlane.xlu0 %1217
        %v1219 = vsub.f32 %v1215, %v1218
        %v1220 = vmul.f32 %v1219, 1.442695
        %v1221 = vpow.pop %v1220
        %v1222 = vsel %vm419, %v1221, 0.0
        %1223 = vadd.xlane.f32.xlu0 %v1222
        %v1224 = vpop.xlane.xlu0 %1223
        %v1225 = vrcp.pop %v1224
        %v1226 = vmul.f32 %v1221, %v1225
        %1227 = vrot.lane.b32.xlu0 %v413, 40
        %v1228 = vpop.permute.xlu0 %1227
        %v1231 = vsel %vm419, %v1226, 0
        %1233 = vmatprep.subr.mxu0 0.0
        %1234 = vmatpush1.msra.mxu0 %v1228
        %1235 = vmatprep.subr.mxu0 0.0
        %1236 = vmatpush1.msra.mxu0 0.0
        %1237 = vmatprep.subr.mxu0 0.0
        %1238 = vmatpush1.msra.mxu0 0.0
        %1239 = vmatprep.subr.mxu0 0.0
        %1240 = vmatpush1.msra.mxu0 0.0
        %1241 = vmatprep.subr.mxu0 0.0
        %1242 = vmatpush1.msra.mxu0 0.0
        %1243 = vmatprep.subr.mxu0 0.0
        %1244 = vmatpush1.msra.mxu0 0.0
        %1245 = vmatprep.subr.mxu0 0.0
        %1246 = vmatpush1.msra.mxu0 0.0
        %1247 = vmatprep.subr.mxu0 0.0
        %1248 = vmatpush1.msra.mxu0 0.0
        %1249 = vmatprep.subr.mxu0 0.0
        %1250 = vmatpush1.msra.mxu0 0.0
        %1251 = vmatprep.subr.mxu0 0.0
        %1252 = vmatpush1.msra.mxu0 0.0
        %1253 = vmatprep.subr.mxu0 0.0
        %1254 = vmatpush1.msra.mxu0 0.0
        %1255 = vmatprep.subr.mxu0 0.0
        %1256 = vmatpush1.msra.mxu0 0.0
        %1257 = vmatprep.subr.mxu0 0.0
        %1258 = vmatpush1.msra.mxu0 0.0
        %1259 = vmatprep.subr.mxu0 0.0
        %1260 = vmatpush1.msra.mxu0 0.0
        %1261 = vmatprep.subr.mxu0 0.0
        %1262 = vmatpush1.msra.mxu0 0.0
        %1263 = vmatprep.subr.mxu0 0.0
        %1264 = vmatpush1.msra.mxu0 0.0
        %1265 = vmatprep.subr.mxu0 0.0
        %1266 = vmatpush1.msra.mxu0 0.0
        %1267 = vmatprep.subr.mxu0 0.0
        %1268 = vmatpush1.msra.mxu0 0.0
        %1269 = vmatprep.subr.mxu0 0.0
        %1270 = vmatpush1.msra.mxu0 0.0
        %1271 = vmatprep.subr.mxu0 0.0
        %1272 = vmatpush1.msra.mxu0 0.0
        %1273 = vmatprep.subr.mxu0 0.0
        %1274 = vmatpush1.msra.mxu0 0.0
        %1275 = vmatprep.subr.mxu0 0.0
        %1276 = vmatpush1.msra.mxu0 0.0
        %1277 = vmatprep.subr.mxu0 0.0
        %1278 = vmatpush1.msra.mxu0 0.0
        %1279 = vmatprep.subr.mxu0 0.0
        %1280 = vmatpush1.msra.mxu0 0.0
        %1281 = vmatprep.subr.mxu0 0.0
        %1282 = vmatpush1.msra.mxu0 0.0
        %1283 = vmatprep.subr.mxu0 0.0
        %1284 = vmatpush1.msra.mxu0 0.0
        %1285 = vmatprep.subr.mxu0 0.0
        %1286 = vmatpush1.msra.mxu0 0.0
        %1287 = vmatprep.subr.mxu0 0.0
        %1288 = vmatpush1.msra.mxu0 0.0
        %1289 = vmatprep.subr.mxu0 0.0
        %1290 = vmatpush1.msra.mxu0 0.0
        %1291 = vmatprep.subr.mxu0 0.0
        %1292 = vmatpush1.msra.mxu0 0.0
        %1293 = vmatprep.subr.mxu0 0.0
        %1294 = vmatpush1.msra.mxu0 0.0
        %1295 = vmatprep.subr.mxu0 0.0
        %1296 = vmatpush1.msra.mxu0 0.0
        %1297 = vmatprep.mubr.f32.mxu0 0.0
        %1298 = vmatmul.mubr.f32.gmra.mrb[0].mxu0 %v1231
        %v1299 = vpop.f32.mrb[0].mxu0
        %v1300 = vadd.f32 0.0, %v1299
        %v1301 = vpop.f32.mrb[0].mxu0
        %1302 = vdwg.mxu0
        %v1303 = vld [vmem:[%s5 + $0x18] sm:$0xff]
        %v1305 = vsel %vm419, %v1300, 0
        %1307 = vmatprep.subr.mxu0 0.0
        %1308 = vmatpush1.msra.mxu0 %v1303
        %1309 = vmatprep.subr.mxu0 0.0
        %1310 = vmatpush1.msra.mxu0 0.0
        %1311 = vmatprep.subr.mxu0 0.0
        %1312 = vmatpush1.msra.mxu0 0.0
        %1313 = vmatprep.subr.mxu0 0.0
        %1314 = vmatpush1.msra.mxu0 0.0
        %1315 = vmatprep.subr.mxu0 0.0
        %1316 = vmatpush1.msra.mxu0 0.0
        %1317 = vmatprep.subr.mxu0 0.0
        %1318 = vmatpush1.msra.mxu0 0.0
        %1319 = vmatprep.subr.mxu0 0.0
        %1320 = vmatpush1.msra.mxu0 0.0
        %1321 = vmatprep.subr.mxu0 0.0
        %1322 = vmatpush1.msra.mxu0 0.0
        %1323 = vmatprep.subr.mxu0 0.0
        %1324 = vmatpush1.msra.mxu0 0.0
        %1325 = vmatprep.subr.mxu0 0.0
        %1326 = vmatpush1.msra.mxu0 0.0
        %1327 = vmatprep.subr.mxu0 0.0
        %1328 = vmatpush1.msra.mxu0 0.0
        %1329 = vmatprep.subr.mxu0 0.0
        %1330 = vmatpush1.msra.mxu0 0.0
        %1331 = vmatprep.subr.mxu0 0.0
        %1332 = vmatpush1.msra.mxu0 0.0
        %1333 = vmatprep.subr.mxu0 0.0
        %1334 = vmatpush1.msra.mxu0 0.0
        %1335 = vmatprep.subr.mxu0 0.0
        %1336 = vmatpush1.msra.mxu0 0.0
        %1337 = vmatprep.subr.mxu0 0.0
        %1338 = vmatpush1.msra.mxu0 0.0
        %1339 = vmatprep.subr.mxu0 0.0
        %1340 = vmatpush1.msra.mxu0 0.0
        %1341 = vmatprep.subr.mxu0 0.0
        %1342 = vmatpush1.msra.mxu0 0.0
        %1343 = vmatprep.subr.mxu0 0.0
        %1344 = vmatpush1.msra.mxu0 0.0
        %1345 = vmatprep.subr.mxu0 0.0
        %1346 = vmatpush1.msra.mxu0 0.0
        %1347 = vmatprep.subr.mxu0 0.0
        %1348 = vmatpush1.msra.mxu0 0.0
        %1349 = vmatprep.subr.mxu0 0.0
        %1350 = vmatpush1.msra.mxu0 0.0
        %1351 = vmatprep.subr.mxu0 0.0
        %1352 = vmatpush1.msra.mxu0 0.0
        %1353 = vmatprep.subr.mxu0 0.0
        %1354 = vmatpush1.msra.mxu0 0.0
        %1355 = vmatprep.subr.mxu0 0.0
        %1356 = vmatpush1.msra.mxu0 0.0
        %1357 = vmatprep.subr.mxu0 0.0
        %1358 = vmatpush1.msra.mxu0 0.0
        %1359 = vmatprep.subr.mxu0 0.0
        %1360 = vmatpush1.msra.mxu0 0.0
        %1361 = vmatprep.subr.mxu0 0.0
        %1362 = vmatpush1.msra.mxu0 0.0
        %1363 = vmatprep.subr.mxu0 0.0
        %1364 = vmatpush1.msra.mxu0 0.0
        %1365 = vmatprep.subr.mxu0 0.0
        %1366 = vmatpush1.msra.mxu0 0.0
        %1367 = vmatprep.subr.mxu0 0.0
        %1368 = vmatpush1.msra.mxu0 0.0
        %1369 = vmatprep.subr.mxu0 0.0
        %1370 = vmatpush1.msra.mxu0 0.0
        %1371 = vmatprep.mubr.f32.mxu0 0.0
        %1372 = vmatmul.mubr.f32.gmra.mrb[0].mxu0 %v1305
        %v1373 = vpop.f32.mrb[0].mxu0
        %v1374 = vadd.f32 0.0, %v1373
        %v1375 = vpop.f32.mrb[0].mxu0
        %1376 = vdwg.mxu0
        %v1377 = vadd.f32 %v1136, %v1374
        %v1378 = vadd.f32 %v300, %v1377
        %v1379 = vld [vmem:[#allocation4] sm:$0x1]
        %v1381 = vlaneseq
        %v1382 = vshrl.u32 %v1381, 7
        %v1383 = vsub.s32 0, %v1382
        %v1384 = vrot.slane %v1379, %v1383
        %v1386 = vadd.f32 %v1378, %v1384
        %1387 = vst.msk [vmem:[%s299] sm:$0xff] %vm303, %v1386
        %p1388 = scmp.lt.s32.totalorder %s20, 1
        %s1389 = scalar_select %p1388, %s20, 1
        %s1390 = smul.addr %s1389, 8
        %s1391 = scalar_lea.vmem %s7, %s1390
        // Predicated region
        $region57: #{transformer_block.2} parent=47 // pred_check
          %p1392 = pneg %p190
        $region58: #{transformer_block.2} parent=47 // pred_check_branch
          %1394 = sbr.rel (%p1392) target = $region60
        $region59: #{transformer_block.2} parent=47 // pred_region
          _
        $region60: #{transformer_block.2} parent=47 // pred_fallthru
          _
      $region48: #{transformer_block.2} parent=5 // pred_fallthru
        _
      %p1395 = scmp.le.s32.totalorder 2, %s15
      // Predicated region
      $region61: #{transformer_block.2} parent=5 // pred_check
        %p1396 = pneg %p1395
      $region62: #{transformer_block.2} parent=5 // pred_check_branch
        %1398 = sbr.rel (%p1396) target = $region64
      $region63: #{transformer_block.2} parent=5 // pred_region
        %s1399 = ssub.s32 %s15, 2
        // Predicated region
        $region65: #{transformer_block.2} parent=63 // pred_check
          %p1400 = pneg %p196
        $region66: #{transformer_block.2} parent=63 // pred_check_branch
          %1402 = sbr.rel (%p1400) target = $region68
        $region67: #{transformer_block.2} parent=63 // pred_region
          %p1403 = scmp.lt.s32.totalorder %s21, 1
          %s1404 = scalar_select %p1403, %s21, 1
          %s1405 = smul.addr %s1404, 8
          %s1406 = scalar_lea.vmem %s7, %s1405
        $region68: #{transformer_block.2} parent=63 // pred_fallthru
          _
      $region64: #{transformer_block.2} parent=5 // pred_fallthru
        _
    $region6: #{transformer_block.2} parent=1 // loop_footer
      %s19 = sadd.s32 1, %s15
    $region7: #{transformer_block.2} parent=1 // loop_footer_branch
      %14 = sbr.rel target = $region3
    $region8: #{transformer_block.2} parent=1 // loop_exit
      _
    %1407 = vsyncpa [#allocation3], 1
    %s1408 = scalar_lea.sflag [#allocation3], 1
    %1409 = vsyncpa %s1408, 1
    %1410 = vsyncpa [#allocation5], 1

</llo_original>
